<compile_context>
chip_gen: v5e
topology: v5e:2x2
jax: 0.10.0
libtpu: 0.0.40
codegen_flags: <defaults>
</compile_context>

<pallas_src>
import functools

import jax
import jax.numpy as jnp
import numpy as np
from jax import lax
from jax.experimental import pallas as pl
from jax.experimental.pallas import tpu as pltpu


def _round_up(v, m):
    return (v + m - 1) // m * m


def _vat_tile_kernel(x_ref, w_ref, wt_ref, b_ref, dnt_ref, out_ref, *,
                     xi, eps, ip, n_total):
    """One row tile of the VAT loss; class/feature math is lane-dense.

    Layout convention: node rows live on the lane axis (last dim); classes and
    features live on sublanes, so softmax / select / normalize run at full
    128-lane occupancy instead of C/128 (or F/128).
    """
    x = x_ref[...].astype(jnp.float32)            # (TN, F) node-feature rows
    w = w_ref[...].astype(jnp.float32)            # (F, C)
    wt = wt_ref[...].astype(jnp.float32)          # (C, F)  (tiny, precomputed)
    tn = x.shape[0]
    c = w.shape[1]

    # Hoisted bias broadcast (JAX does not CSE broadcast_in_dim).
    b_col = jnp.broadcast_to(b_ref[...].astype(jnp.float32), (c, tn))

    # logits0^T = W^T X^T + b  (contract F, the last dim of both operands).
    logits0 = lax.dot_general(wt, x, (((1,), (1,)), ((), ())),
                              preferred_element_type=jnp.float32) + b_col   # (C, TN)

    # pred = argmax over classes (CrossEntropyLoss branch); first max index.
    cls = lax.broadcasted_iota(jnp.int32, (c, tn), 0)
    cmax = jnp.max(logits0, axis=0, keepdims=True)
    pred = jnp.min(jnp.where(logits0 == cmax, cls, c), axis=0, keepdims=True)
    onehot = (cls == pred).astype(jnp.float32)                              # (C, TN)

    def l2n(d):
        # per-node (per-lane) L2 normalize over features (sublane axis);
        # matches torch: d / (norm(d, dim=1, keepdim=True) + 1e-8).
        nrm = jnp.sqrt(jnp.sum(d * d, axis=0, keepdims=True))
        return d / (nrm + 1e-8)

    dn = l2n(dnt_ref[...].astype(jnp.float32))                              # (F, TN)

    def body(_, d):
        # Linearity: logits(x + xi*d) = logits0 + xi * (W^T d).
        delta = lax.dot_general(wt, d, (((1,), (0,)), ((), ())),
                                preferred_element_type=jnp.float32)         # (C, TN)
        lh = logits0 + xi * delta
        lh = lh - jnp.max(lh, axis=0, keepdims=True)
        p = jnp.exp(lh)
        p = p / jnp.sum(p, axis=0, keepdims=True)
        # dCE/d(logits) up to a positive scale; the global 1/N and the xi
        # chain-rule factors cancel inside l2n — do NOT reintroduce them.
        g = p - onehot                                                      # (C, TN)
        g_x = lax.dot_general(w, g, (((1,), (0,)), ((), ())),
                              preferred_element_type=jnp.float32)           # (F, TN)
        return l2n(g_x)

    dn = lax.fori_loop(0, ip, body, dn, unroll=True)

    # Final adversarial CE per node, again via linearity.
    delta = lax.dot_general(wt, dn, (((1,), (0,)), ((), ())),
                            preferred_element_type=jnp.float32)
    la = logits0 + eps * delta                                              # (C, TN)
    m = jnp.max(la, axis=0, keepdims=True)
    lse = m + jnp.log(jnp.sum(jnp.exp(la - m), axis=0, keepdims=True))
    picked = jnp.sum(la * onehot, axis=0, keepdims=True)
    ce = lse - picked                                                       # (1, TN)

    # Mask ragged-tail rows (their tile contents are undefined) and reduce to
    # a single per-tile partial sum in-kernel.
    lane = lax.broadcasted_iota(jnp.int32, (1, tn), 1)
    valid = (pl.program_id(0) * tn + lane) < n_total
    partial = jnp.sum(jnp.where(valid, ce, 0.0))

    # Lane-dense (8,128) output block: partial sum at [0,0], zeros elsewhere,
    # so the wrapper simply sums the whole (tiny) output array.
    rr = lax.broadcasted_iota(jnp.int32, (8, 128), 0)
    cc = lax.broadcasted_iota(jnp.int32, (8, 128), 1)
    out_ref[...] = jnp.where((rr == 0) & (cc == 0), partial, 0.0)


def vat_loss(x, w, b, dn_init=None, *, key=None, xi=0.001, eps=2.5, ip=1,
             tile_rows=4096, interpret=False):
    """VAT loss for a linear node classifier logits = x @ w + b.

    dn_init: optional explicit (N, F) initial random direction (rand-0.5);
             None -> generated from `key` (already transposed, no HBM cost).
    """
    n, f = x.shape
    c = w.shape[-1]

    # dn^T of shape (F, N): the kernel's power iteration is lane-dense.
    if dn_init is None:
        key = jax.random.PRNGKey(0) if key is None else key
        dn_t = jax.random.uniform(key, (f, n), dtype=jnp.float32) - 0.5
    else:
        dn_t = jnp.asarray(dn_init, jnp.float32).T

    # Row-tile size: multiple of 128 (lane-dense dn^T / output blocks), large
    # by default to amortize per-step pipeline overhead, capped so the grid
    # keeps >= 2 independent tiles when possible (v7x dual TensorCore).
    tn = min(_round_up(max(int(tile_rows), 128), 128),
             max(128, _round_up(pl.cdiv(n, 2), 128)))
    grid_n = pl.cdiv(n, tn)

    # x + dn^T streams, double-buffered, f32.  Only raise the scoped-VMEM cap
    # (16 MiB default on v5e) when very large tiles are requested.
    stream_bytes = 2 * 2 * tn * f * 4
    vmem_limit = None
    if stream_bytes > 12 * 1024 * 1024:
        vmem_limit = min(2 * stream_bytes + (4 << 20), 56 * 1024 * 1024)

    kernel = functools.partial(_vat_tile_kernel, xi=float(xi), eps=float(eps),
                               ip=int(ip), n_total=n)

    parts = pl.pallas_call(
        kernel,
        out_shape=jax.ShapeDtypeStruct((grid_n * 8, 128), jnp.float32),
        grid=(grid_n,),
        in_specs=[
            pl.BlockSpec((tn, f), lambda i: (i, 0)),   # x row tile (pipelined)
            pl.BlockSpec((f, c), lambda i: (0, 0)),    # W      (same block)
            pl.BlockSpec((c, f), lambda i: (0, 0)),    # W^T    (tiny)
            pl.BlockSpec((c, 1), lambda i: (0, 0)),    # bias column
            pl.BlockSpec((f, tn), lambda i: (0, i)),   # dn^T tile (pipelined)
        ],
        out_specs=pl.BlockSpec((8, 128), lambda i: (i, 0)),
        compiler_params=pltpu.CompilerParams(
            dimension_semantics=("parallel",),         # row tiles independent
            vmem_limit_bytes=vmem_limit),
        interpret=interpret,
    )(x, w, jnp.asarray(w).T, jnp.asarray(b).reshape(-1, 1), dn_t)

    # Per-tile partials already exclude padded rows; mean over the TOTAL N.
    return jnp.sum(parts) / n


def _vat_loss_ref(x, w, b, dn, *, xi=0.001, eps=2.5, ip=1):
    """Pure-JAX reference (explicit dn path) for correctness checking."""
    def forward(feat):
        return feat @ w + b[None, :]

    def l2n(d):
        return d / (jnp.linalg.norm(d, axis=-1, keepdims=True) + 1e-8)

    logits = forward(x)
    pred = jnp.argmax(logits, axis=-1)
    onehot = jax.nn.one_hot(pred, w.shape[1], dtype=jnp.float32)

    dn = l2n(dn)
    for _ in range(ip):
        lh = forward(x + xi * dn)
        p = jax.nn.softmax(lh, axis=-1)
        g_x = ((p - onehot) / x.shape[0]) @ w.T
        dn = l2n(g_x)

    la = forward(x + eps * dn)
    logp = jax.nn.log_softmax(la, axis=-1)
    return -jnp.mean(jnp.sum(logp * onehot, axis=-1))


if __name__ == "__main__":
    # f32-accurate matmuls in the pure-JAX reference so the comparison is not
    # polluted by XLA's default reduced-precision matmuls on TPU.
    jax.config.update("jax_default_matmul_precision", "highest")

    N, F, C = 200, 32, 8   # nodes, node-feature dim, num classes

    key = jax.random.PRNGKey(0)
    kx, kw, kb, kd = jax.random.split(key, 4)

    x = jax.random.normal(kx, (N, F), dtype=jnp.float32)
    w = jax.random.normal(kw, (F, C), dtype=jnp.float32) * 0.1
    b = jax.random.normal(kb, (C,), dtype=jnp.float32) * 0.01
    # dn = torch.rand(shape) - 0.5  (explicit, for deterministic comparison)
    dn0 = jax.random.uniform(kd, (N, F), dtype=jnp.float32) - 0.5

    # 1) deterministic dn, multi-tile ragged grid (tile_rows=128 -> 2 tiles)
    lds = vat_loss(x, w, b, dn0, xi=0.001, eps=2.5, ip=1, tile_rows=128)
    jax.block_until_ready(lds)
    lds_ref = _vat_loss_ref(x, w, b, dn0, xi=0.001, eps=2.5, ip=1)
    np.testing.assert_allclose(np.asarray(lds), np.asarray(lds_ref),
                               rtol=1e-4, atol=1e-5)

    # 2) exercise the unrolled power-iteration loop (ip=3)
    lds3 = vat_loss(x, w, b, dn0, xi=0.001, eps=2.5, ip=3, tile_rows=128)
    jax.block_until_ready(lds3)
    lds3_ref = _vat_loss_ref(x, w, b, dn0, xi=0.001, eps=2.5, ip=3)
    np.testing.assert_allclose(np.asarray(lds3), np.asarray(lds3_ref),
                               rtol=1e-4, atol=1e-5)

    # 3) default path: wrapper-generated random dn (matches torch.rand - 0.5),
    #    default large tile_rows; no bit-exact reference -> finiteness check.
    lds_r = vat_loss(x, w, b, None, key=jax.random.PRNGKey(42),
                     xi=0.001, eps=2.5, ip=1)
    jax.block_until_ready(lds_r)
    assert np.isfinite(np.asarray(lds_r)), "random-dn path produced non-finite loss"

    print("KERNEL_OK")
</pallas_src>

<mosaic_0001>
module attributes {stable_mosaic.version = 11 : i64} {
  func.func @_vat_tile_kernel(%arg0: i32, %arg1: memref<128x32xf32, #tpu.memory_space<vmem>>, %arg2: memref<32x8xf32, #tpu.memory_space<vmem>>, %arg3: memref<8x32xf32, #tpu.memory_space<vmem>>, %arg4: memref<8x1xf32, #tpu.memory_space<vmem>>, %arg5: memref<32x128xf32, #tpu.memory_space<vmem>>, %arg6: memref<8x128xf32, #tpu.memory_space<vmem>>) attributes {dimension_semantics = [#tpu.dimension_semantics<parallel>], iteration_bounds = array<i64: 2>, scalar_prefetch = 0 : i64, scratch_operands = 0 : i64, tpu.core_type = #tpu.core_type<tc>, window_params = [{transform_indices = @transform_0, window_bounds = array<i64: 128, 32>}, {pipeline_mode = #tpu.pipeline_mode<synchronous>, transform_indices = @transform_1, window_bounds = array<i64: 32, 8>}, {pipeline_mode = #tpu.pipeline_mode<synchronous>, transform_indices = @transform_2, window_bounds = array<i64: 8, 32>}, {pipeline_mode = #tpu.pipeline_mode<synchronous>, transform_indices = @transform_3, window_bounds = array<i64: 8, 1>}, {transform_indices = @transform_4, window_bounds = array<i64: 32, 128>}, {transform_indices = @transform_5, window_bounds = array<i64: 8, 128>}]} {
    %c0 = arith.constant 0 : index
    %c0_0 = arith.constant 0 : index
    %0 = vector.load %arg1[%c0, %c0_0] : memref<128x32xf32, #tpu.memory_space<vmem>>, vector<128x32xf32>
    %c0_1 = arith.constant 0 : index
    %c0_2 = arith.constant 0 : index
    %1 = vector.load %arg2[%c0_1, %c0_2] : memref<32x8xf32, #tpu.memory_space<vmem>>, vector<32x8xf32>
    %c0_3 = arith.constant 0 : index
    %c0_4 = arith.constant 0 : index
    %2 = vector.load %arg3[%c0_3, %c0_4] : memref<8x32xf32, #tpu.memory_space<vmem>>, vector<8x32xf32>
    %c0_5 = arith.constant 0 : index
    %c0_6 = arith.constant 0 : index
    %3 = vector.load %arg4[%c0_5, %c0_6] : memref<8x1xf32, #tpu.memory_space<vmem>>, vector<8x1xf32>
    %4 = vector.shape_cast %3 : vector<8x1xf32> to vector<8x1xf32>
    %5 = vector.broadcast %4 : vector<8x1xf32> to vector<8x128xf32>
    %cst = arith.constant dense<0.000000e+00> : vector<8x128xf32>
    %6 = tpu.matmul %2, %0, %cst {dimension_numbers = #tpu.dot_dimension_numbers<[1], [1], [0], [0], [0, 0, 1, 0], [], []>, precision = #tpu.contract_precision<fp32>} : vector<8x32xf32>, vector<128x32xf32>, vector<8x128xf32> -> vector<8x128xf32>
    %7 = arith.addf %6, %5 : vector<8x128xf32>
    %8 = tpu.iota {dimensions = array<i32: 0>} : vector<8x128xi32>
    %cst_7 = arith.constant dense<0xFF800000> : vector<128xf32>
    %9 = vector.multi_reduction <maximumf>, %7, %cst_7 [0] : vector<8x128xf32> to vector<128xf32>
    %10 = vector.shape_cast %9 : vector<128xf32> to vector<1x128xf32>
    %11 = vector.broadcast %10 : vector<1x128xf32> to vector<8x128xf32>
    %12 = arith.cmpf oeq, %7, %11 : vector<8x128xf32>
    %c8_i32 = arith.constant 8 : i32
    %13 = vector.broadcast %c8_i32 : i32 to vector<8x128xi32>
    %14 = arith.select %12, %8, %13 : vector<8x128xi1>, vector<8x128xi32>
    %cst_8 = arith.constant dense<2147483647> : vector<128xi32>
    %15 = vector.multi_reduction <minsi>, %14, %cst_8 [0] : vector<8x128xi32> to vector<128xi32>
    %16 = vector.shape_cast %15 : vector<128xi32> to vector<1x128xi32>
    %17 = vector.broadcast %16 : vector<1x128xi32> to vector<8x128xi32>
    %18 = arith.cmpi eq, %8, %17 : vector<8x128xi32>
    %19 = arith.extui %18 : vector<8x128xi1> to vector<8x128xi32>
    %20 = arith.sitofp %19 : vector<8x128xi32> to vector<8x128xf32>
    %c0_9 = arith.constant 0 : index
    %c0_10 = arith.constant 0 : index
    %21 = vector.load %arg5[%c0_9, %c0_10] : memref<32x128xf32, #tpu.memory_space<vmem>>, vector<32x128xf32>
    %22 = arith.mulf %21, %21 : vector<32x128xf32>
    %cst_11 = arith.constant dense<0.000000e+00> : vector<128xf32>
    %23 = vector.multi_reduction <add>, %22, %cst_11 [0] : vector<32x128xf32> to vector<128xf32>
    %24 = vector.shape_cast %23 : vector<128xf32> to vector<1x128xf32>
    %25 = math.sqrt %24 : vector<1x128xf32>
    %cst_12 = arith.constant 9.99999993E-9 : f32
    %26 = vector.broadcast %cst_12 : f32 to vector<1x128xf32>
    %27 = arith.addf %25, %26 : vector<1x128xf32>
    %28 = vector.broadcast %27 : vector<1x128xf32> to vector<32x128xf32>
    %29 = arith.divf %21, %28 : vector<32x128xf32>
    %c0_i32 = arith.constant 0 : i32
    %cst_13 = arith.constant dense<0.000000e+00> : vector<8x128xf32>
    %30 = tpu.matmul %2, %29, %cst_13 {dimension_numbers = #tpu.dot_dimension_numbers<[1], [0], [0], [1], [0, 0, 1, 1], [], []>, precision = #tpu.contract_precision<fp32>} : vector<8x32xf32>, vector<32x128xf32>, vector<8x128xf32> -> vector<8x128xf32>
    %cst_14 = arith.constant 1.000000e-03 : f32
    %31 = vector.broadcast %cst_14 : f32 to vector<8x128xf32>
    %32 = arith.mulf %31, %30 : vector<8x128xf32>
    %33 = arith.addf %7, %32 : vector<8x128xf32>
    %cst_15 = arith.constant dense<0xFF800000> : vector<128xf32>
    %34 = vector.multi_reduction <maximumf>, %33, %cst_15 [0] : vector<8x128xf32> to vector<128xf32>
    %35 = vector.shape_cast %34 : vector<128xf32> to vector<1x128xf32>
    %36 = vector.broadcast %35 : vector<1x128xf32> to vector<8x128xf32>
    %37 = arith.subf %33, %36 : vector<8x128xf32>
    %38 = math.exp %37 : vector<8x128xf32>
    %cst_16 = arith.constant dense<0.000000e+00> : vector<128xf32>
    %39 = vector.multi_reduction <add>, %38, %cst_16 [0] : vector<8x128xf32> to vector<128xf32>
    %40 = vector.shape_cast %39 : vector<128xf32> to vector<1x128xf32>
    %41 = vector.broadcast %40 : vector<1x128xf32> to vector<8x128xf32>
    %42 = arith.divf %38, %41 : vector<8x128xf32>
    %43 = arith.subf %42, %20 : vector<8x128xf32>
    %cst_17 = arith.constant dense<0.000000e+00> : vector<32x128xf32>
    %44 = tpu.matmul %1, %43, %cst_17 {dimension_numbers = #tpu.dot_dimension_numbers<[1], [0], [0], [1], [0, 0, 1, 1], [], []>, precision = #tpu.contract_precision<fp32>} : vector<32x8xf32>, vector<8x128xf32>, vector<32x128xf32> -> vector<32x128xf32>
    %45 = arith.mulf %44, %44 : vector<32x128xf32>
    %cst_18 = arith.constant dense<0.000000e+00> : vector<128xf32>
    %46 = vector.multi_reduction <add>, %45, %cst_18 [0] : vector<32x128xf32> to vector<128xf32>
    %47 = vector.shape_cast %46 : vector<128xf32> to vector<1x128xf32>
    %48 = math.sqrt %47 : vector<1x128xf32>
    %cst_19 = arith.constant 9.99999993E-9 : f32
    %49 = vector.broadcast %cst_19 : f32 to vector<1x128xf32>
    %50 = arith.addf %48, %49 : vector<1x128xf32>
    %51 = vector.broadcast %50 : vector<1x128xf32> to vector<32x128xf32>
    %52 = arith.divf %44, %51 : vector<32x128xf32>
    %cst_20 = arith.constant dense<0.000000e+00> : vector<8x128xf32>
    %53 = tpu.matmul %2, %52, %cst_20 {dimension_numbers = #tpu.dot_dimension_numbers<[1], [0], [0], [1], [0, 0, 1, 1], [], []>, precision = #tpu.contract_precision<fp32>} : vector<8x32xf32>, vector<32x128xf32>, vector<8x128xf32> -> vector<8x128xf32>
    %cst_21 = arith.constant 2.500000e+00 : f32
    %54 = vector.broadcast %cst_21 : f32 to vector<8x128xf32>
    %55 = arith.mulf %54, %53 : vector<8x128xf32>
    %56 = arith.addf %7, %55 : vector<8x128xf32>
    %cst_22 = arith.constant dense<0xFF800000> : vector<128xf32>
    %57 = vector.multi_reduction <maximumf>, %56, %cst_22 [0] : vector<8x128xf32> to vector<128xf32>
    %58 = vector.shape_cast %57 : vector<128xf32> to vector<1x128xf32>
    %59 = vector.broadcast %58 : vector<1x128xf32> to vector<8x128xf32>
    %60 = arith.subf %56, %59 : vector<8x128xf32>
    %61 = math.exp %60 : vector<8x128xf32>
    %cst_23 = arith.constant dense<0.000000e+00> : vector<128xf32>
    %62 = vector.multi_reduction <add>, %61, %cst_23 [0] : vector<8x128xf32> to vector<128xf32>
    %63 = vector.shape_cast %62 : vector<128xf32> to vector<1x128xf32>
    %64 = math.log %63 : vector<1x128xf32>
    %65 = arith.addf %58, %64 : vector<1x128xf32>
    %66 = arith.mulf %56, %20 : vector<8x128xf32>
    %cst_24 = arith.constant dense<0.000000e+00> : vector<128xf32>
    %67 = vector.multi_reduction <add>, %66, %cst_24 [0] : vector<8x128xf32> to vector<128xf32>
    %68 = vector.shape_cast %67 : vector<128xf32> to vector<1x128xf32>
    %69 = arith.subf %65, %68 : vector<1x128xf32>
    %70 = tpu.iota {dimensions = array<i32: 1>} : vector<1x128xi32>
    %c128_i32 = arith.constant 128 : i32
    %71 = arith.muli %arg0, %c128_i32 : i32
    %72 = vector.broadcast %71 : i32 to vector<1x128xi32>
    %73 = arith.addi %72, %70 : vector<1x128xi32>
    %c200_i32 = arith.constant 200 : i32
    %74 = vector.broadcast %c200_i32 : i32 to vector<1x128xi32>
    %75 = arith.cmpi slt, %73, %74 : vector<1x128xi32>
    %cst_25 = arith.constant 0.000000e+00 : f32
    %76 = vector.broadcast %cst_25 : f32 to vector<1x128xf32>
    %77 = arith.select %75, %69, %76 : vector<1x128xi1>, vector<1x128xf32>
    %78 = vector.shape_cast %77 : vector<1x128xf32> to vector<1x1x128xf32>
    %cst_26 = arith.constant dense<0.000000e+00> : vector<1xf32>
    %79 = vector.multi_reduction <add>, %78, %cst_26 [1, 2] : vector<1x1x128xf32> to vector<1xf32>
    %80 = vector.shape_cast %79 : vector<1xf32> to vector<1x1x1xf32>
    %81 = vector.extract %80[0, 0, 0] : f32 from vector<1x1x1xf32>
    %82 = tpu.iota {dimensions = array<i32: 0>} : vector<8x128xi32>
    %83 = tpu.iota {dimensions = array<i32: 1>} : vector<8x128xi32>
    %c0_i32_27 = arith.constant 0 : i32
    %84 = vector.broadcast %c0_i32_27 : i32 to vector<8x128xi32>
    %85 = arith.cmpi eq, %82, %84 : vector<8x128xi32>
    %c0_i32_28 = arith.constant 0 : i32
    %86 = vector.broadcast %c0_i32_28 : i32 to vector<8x128xi32>
    %87 = arith.cmpi eq, %83, %86 : vector<8x128xi32>
    %88 = arith.andi %85, %87 : vector<8x128xi1>
    %cst_29 = arith.constant 0.000000e+00 : f32
    %89 = vector.broadcast %81 : f32 to vector<8x128xf32>
    %90 = vector.broadcast %cst_29 : f32 to vector<8x128xf32>
    %91 = arith.select %88, %89, %90 : vector<8x128xi1>, vector<8x128xf32>
    %c0_30 = arith.constant 0 : index
    %c0_31 = arith.constant 0 : index
    %92 = vector.load %arg6[%c0_30, %c0_31] : memref<8x128xf32, #tpu.memory_space<vmem>>, vector<8x128xf32>
    tpu.vector_store %arg6[%c0_30, %c0_31], %91 {strides = array<i32>} : memref<8x128xf32, #tpu.memory_space<vmem>>, vector<8x128xf32>,
    return
  }
  func.func @transform_0(%arg0: i32) -> (i32, i32) {
    %c0_i32 = arith.constant 0 : i32
    %c0_i32_0 = arith.constant 0 : i32
    return %arg0, %c0_i32 : i32, i32
  }
  func.func @transform_1(%arg0: i32) -> (i32, i32) {
    %c0_i32 = arith.constant 0 : i32
    %c0_i32_0 = arith.constant 0 : i32
    %c0_i32_1 = arith.constant 0 : i32
    return %c0_i32, %c0_i32_0 : i32, i32
  }
  func.func @transform_2(%arg0: i32) -> (i32, i32) {
    %c0_i32 = arith.constant 0 : i32
    %c0_i32_0 = arith.constant 0 : i32
    %c0_i32_1 = arith.constant 0 : i32
    return %c0_i32, %c0_i32_0 : i32, i32
  }
  func.func @transform_3(%arg0: i32) -> (i32, i32) {
    %c0_i32 = arith.constant 0 : i32
    %c0_i32_0 = arith.constant 0 : i32
    %c0_i32_1 = arith.constant 0 : i32
    return %c0_i32, %c0_i32_0 : i32, i32
  }
  func.func @transform_4(%arg0: i32) -> (i32, i32) {
    %c0_i32 = arith.constant 0 : i32
    %c0_i32_0 = arith.constant 0 : i32
    return %c0_i32, %arg0 : i32, i32
  }
  func.func @transform_5(%arg0: i32) -> (i32, i32) {
    %c0_i32 = arith.constant 0 : i32
    %c0_i32_0 = arith.constant 0 : i32
    return %arg0, %c0_i32 : i32, i32
  }
}

</mosaic_0001>

<llo_original>
// kernel: tpu_custom_call.1
$region0: #{tpu_custom_call.1}
  #allocation0 [shape = 'u32[]', space=smem, size = 0x4, offset = 0x4, fixed_abs, tag = 'smem constant byte address 0x4 - core index']
  #allocation1 [shape = 'u32[72,128]{1,0:T(1,128)}', space=vmem, size = 0x9000, scoped, tag = 'internal scratch']
  %s0 = inlined_call_operand.vmem [shape: f32[200,32], index: 0, kind: input, shape index: {}]
  %s1 = inlined_call_operand.vmem [shape: f32[32,8], index: 1, kind: input, shape index: {}]
  %s2 = inlined_call_operand.vmem [shape: f32[8,32], index: 2, kind: input, shape index: {}]
  %s3 = inlined_call_operand.vmem [shape: f32[8,1], index: 3, kind: input, shape index: {}]
  %s4 = inlined_call_operand.vmem [shape: f32[32,200], index: 4, kind: input, shape index: {}]
  %s5 = inlined_call_operand.hbm [shape: f32[16,128], index: 5, kind: output, shape index: {}]
  %s6 = sld [smem:[#allocation0]]
  $region91: #{tpu_custom_call.1} parent=0
    _
  %s8 = ssub.s32 1, %s6
  %s9 = scalar_select 0, %s8, %s6
  $region1: #{tpu_custom_call.1} parent=0
    #allocation2 [shape = 'u8[32768]{0}', space=vmem, size = 0x8000, scoped, tag = 'input window, operand 4']
    #allocation3 [shape = 'u8[8192]{0}', space=vmem, size = 0x2000, scoped, tag = 'output window, operand 0']
    #allocation4 [shape = 's32[2]{0}', space=sflag, size = 0x8, scoped, tag = 'scoped memory for tpu_custom_call.1']
    %10 = vsyncpa [#allocation4], 0
    %s11 = scalar_lea.sflag [#allocation4], 1
    %12 = vsyncpa %s11, 0
    loop: start=0, step=1, limit=4
    $region2: #{tpu_custom_call.1} parent=1 // loop_pre_header
      _
    $region3: #{tpu_custom_call.1} parent=1 // loop_header
      %s14 = sphi 0, %s18
      %p15 = scmp.ge.s32.totalorder %s14, 4
      %s24 = sphi 0, %s26
      %s27 = sphi 0, %s24
      %s28 = sphi 0, %s27
      %s44 = sphi 0, %s28
      %s48 = sphi 0, %s48
      %s50 = sphi 0, %s48
      %s51 = sphi 0, %s50
      %s65 = sphi 0, %s51
      %s69 = sphi 0, %s69
      %s71 = sphi 0, %s69
      %s72 = sphi 0, %s71
      %s86 = sphi 0, %s72
      %s90 = sphi 0, %s90
      %s92 = sphi 0, %s90
      %s93 = sphi 0, %s92
      %s107 = sphi 0, %s93
      %s113 = sphi 0, %s115
      %s116 = sphi 0, %s113
      %s117 = sphi 0, %s116
      %s133 = sphi 0, %s117
      %s139 = sphi 0, %s141
      %s142 = sphi 0, %s139
      %s143 = sphi 0, %s142
      %s159 = sphi 0, %s143
    $region4: #{tpu_custom_call.1} parent=1 // loop_header_branch
      %17 = sbr.rel (%p15) target = $region8
    $region5: #{tpu_custom_call.1} parent=1 // loop_body
      %s19 = ssub.s32 %s14, 1
      %s20 = ssub.s32 %s14, 2
      %s21 = sadd.s32 %s14, 1
      %s22 = ssub.s32 %s14, %s21
      %p23 = scmp.eq.s32.totalorder %s22, 0
      %s25 = sadd.s32 %s24, 1
      %s26 = scalar_select %p23, %s24, %s25
      %p29 = pneg %p23
      %p30 = scmp.eq.s32.totalorder %s14, 1
      %p31 = por %p29, %p30
      %p32 = scmp.ne.s32.totalorder %s24, %s27
      %p33 = scmp.eq.s32.totalorder %s14, 0
      %p34 = por %p32, %p33
      %p35 = scmp.ne.s32.totalorder %s24, %s27
      %p36 = scmp.eq.s32.totalorder %s19, 1
      %p37 = por %p35, %p36
      %p38 = scmp.ne.s32.totalorder %s27, %s28
      %p39 = scmp.eq.s32.totalorder %s19, 0
      %p40 = por %p38, %p39
      %p41 = scmp.ne.s32.totalorder %s27, %s28
      %p42 = scmp.eq.s32.totalorder %s20, 1
      %p43 = por %p41, %p42
      %p45 = scmp.ne.s32.totalorder %s28, %s44
      %p46 = scmp.eq.s32.totalorder %s20, 0
      %p47 = por %p45, %p46
      %s49 = sadd.s32 %s48, 1
      %p52 = scmp.eq.s32.totalorder %s14, 1
      %p53 = scmp.ne.s32.totalorder %s48, %s50
      %p54 = scmp.eq.s32.totalorder %s14, 0
      %p55 = por %p53, %p54
      %p56 = scmp.ne.s32.totalorder %s48, %s50
      %p57 = scmp.eq.s32.totalorder %s19, 1
      %p58 = por %p56, %p57
      %p59 = scmp.ne.s32.totalorder %s50, %s51
      %p60 = scmp.eq.s32.totalorder %s19, 0
      %p61 = por %p59, %p60
      %p62 = scmp.ne.s32.totalorder %s50, %s51
      %p63 = scmp.eq.s32.totalorder %s20, 1
      %p64 = por %p62, %p63
      %p66 = scmp.ne.s32.totalorder %s51, %s65
      %p67 = scmp.eq.s32.totalorder %s20, 0
      %p68 = por %p66, %p67
      %s70 = sadd.s32 %s69, 1
      %p73 = scmp.eq.s32.totalorder %s14, 1
      %p74 = scmp.ne.s32.totalorder %s69, %s71
      %p75 = scmp.eq.s32.totalorder %s14, 0
      %p76 = por %p74, %p75
      %p77 = scmp.ne.s32.totalorder %s69, %s71
      %p78 = scmp.eq.s32.totalorder %s19, 1
      %p79 = por %p77, %p78
      %p80 = scmp.ne.s32.totalorder %s71, %s72
      %p81 = scmp.eq.s32.totalorder %s19, 0
      %p82 = por %p80, %p81
      %p83 = scmp.ne.s32.totalorder %s71, %s72
      %p84 = scmp.eq.s32.totalorder %s20, 1
      %p85 = por %p83, %p84
      %p87 = scmp.ne.s32.totalorder %s72, %s86
      %p88 = scmp.eq.s32.totalorder %s20, 0
      %p89 = por %p87, %p88
      %s91 = sadd.s32 %s90, 1
      %p94 = scmp.eq.s32.totalorder %s14, 1
      %p95 = scmp.ne.s32.totalorder %s90, %s92
      %p96 = scmp.eq.s32.totalorder %s14, 0
      %p97 = por %p95, %p96
      %p98 = scmp.ne.s32.totalorder %s90, %s92
      %p99 = scmp.eq.s32.totalorder %s19, 1
      %p100 = por %p98, %p99
      %p101 = scmp.ne.s32.totalorder %s92, %s93
      %p102 = scmp.eq.s32.totalorder %s19, 0
      %p103 = por %p101, %p102
      %p104 = scmp.ne.s32.totalorder %s92, %s93
      %p105 = scmp.eq.s32.totalorder %s20, 1
      %p106 = por %p104, %p105
      %p108 = scmp.ne.s32.totalorder %s93, %s107
      %p109 = scmp.eq.s32.totalorder %s20, 0
      %p110 = por %p108, %p109
      %s111 = ssub.s32 %s14, %s21
      %p112 = scmp.eq.s32.totalorder %s111, 0
      %s114 = sadd.s32 %s113, 1
      %s115 = scalar_select %p112, %s113, %s114
      %p118 = pneg %p112
      %p119 = scmp.eq.s32.totalorder %s14, 1
      %p120 = por %p118, %p119
      %p121 = scmp.ne.s32.totalorder %s113, %s116
      %p122 = scmp.eq.s32.totalorder %s14, 0
      %p123 = por %p121, %p122
      %p124 = scmp.ne.s32.totalorder %s113, %s116
      %p125 = scmp.eq.s32.totalorder %s19, 1
      %p126 = por %p124, %p125
      %p127 = scmp.ne.s32.totalorder %s116, %s117
      %p128 = scmp.eq.s32.totalorder %s19, 0
      %p129 = por %p127, %p128
      %p130 = scmp.ne.s32.totalorder %s116, %s117
      %p131 = scmp.eq.s32.totalorder %s20, 1
      %p132 = por %p130, %p131
      %p134 = scmp.ne.s32.totalorder %s117, %s133
      %p135 = scmp.eq.s32.totalorder %s20, 0
      %p136 = por %p134, %p135
      %s137 = ssub.s32 %s14, %s21
      %p138 = scmp.eq.s32.totalorder %s137, 0
      %s140 = sadd.s32 %s139, 1
      %s141 = scalar_select %p138, %s139, %s140
      %p144 = pneg %p138
      %p145 = scmp.eq.s32.totalorder %s14, 1
      %p146 = por %p144, %p145
      %p147 = scmp.ne.s32.totalorder %s139, %s142
      %p148 = scmp.eq.s32.totalorder %s14, 0
      %p149 = por %p147, %p148
      %p150 = scmp.ne.s32.totalorder %s139, %s142
      %p151 = scmp.eq.s32.totalorder %s19, 1
      %p152 = por %p150, %p151
      %p153 = scmp.ne.s32.totalorder %s142, %s143
      %p154 = scmp.eq.s32.totalorder %s19, 0
      %p155 = por %p153, %p154
      %p156 = scmp.ne.s32.totalorder %s142, %s143
      %p157 = scmp.eq.s32.totalorder %s20, 1
      %p158 = por %p156, %p157
      %p160 = scmp.ne.s32.totalorder %s143, %s159
      %p161 = scmp.eq.s32.totalorder %s20, 0
      %p162 = por %p160, %p161
      %p163 = scmp.le.s32.totalorder 1, %s14
      %p164 = scmp.lt.s32.totalorder %s14, 3
      %p165 = pnand %p163, %p164
      %p166 = pneg %p165
      // Predicated region
      $region9: #{tpu_custom_call.1} parent=5 // pred_check
        _
      $region10: #{tpu_custom_call.1} parent=5 // pred_check_branch
        %168 = sbr.rel (%p165) target = $region12
      $region11: #{tpu_custom_call.1} parent=5 // pred_region
        %s169 = ssub.s32 %s14, 1
        // Predicated region
        $region13: #{tpu_custom_call.1} parent=11 // pred_check
          %p170 = pneg %p61
        $region14: #{tpu_custom_call.1} parent=11 // pred_check_branch
          %172 = sbr.rel (%p170) target = $region16
        $region15: #{tpu_custom_call.1} parent=11 // pred_region
          _
        $region16: #{tpu_custom_call.1} parent=11 // pred_fallthru
          _
        // Predicated region
        $region17: #{tpu_custom_call.1} parent=11 // pred_check
          %p173 = pneg %p82
        $region18: #{tpu_custom_call.1} parent=11 // pred_check_branch
          %175 = sbr.rel (%p173) target = $region20
        $region19: #{tpu_custom_call.1} parent=11 // pred_region
          _
        $region20: #{tpu_custom_call.1} parent=11 // pred_fallthru
          _
        // Predicated region
        $region21: #{tpu_custom_call.1} parent=11 // pred_check
          %p176 = pneg %p103
        $region22: #{tpu_custom_call.1} parent=11 // pred_check_branch
          %178 = sbr.rel (%p176) target = $region24
        $region23: #{tpu_custom_call.1} parent=11 // pred_region
          _
        $region24: #{tpu_custom_call.1} parent=11 // pred_fallthru
          _
      $region12: #{tpu_custom_call.1} parent=5 // pred_fallthru
        _
      %p179 = scmp.lt.s32.totalorder %s14, 2
      // Predicated region
      $region25: #{tpu_custom_call.1} parent=5 // pred_check
        %p180 = pneg %p179
      $region26: #{tpu_custom_call.1} parent=5 // pred_check_branch
        %182 = sbr.rel (%p180) target = $region28
      $region27: #{tpu_custom_call.1} parent=5 // pred_region
        // Predicated region
        $region29: #{tpu_custom_call.1} parent=27 // pred_check
          %p183 = pneg %p34
        $region30: #{tpu_custom_call.1} parent=27 // pred_check_branch
          %185 = sbr.rel (%p183) target = $region32
        $region31: #{tpu_custom_call.1} parent=27 // pred_region
          %s186 = smul.u32 16, %s14
          %s187 = ssub.s32 25, %s186
          %p188 = scmp.lt.s32.totalorder %s187, 16
          %s189 = scalar_select %p188, %s187, 16
          %s190 = smul.u32 8, %s189
          %p191 = scmp.lt.s32.totalorder %s186, 24
          %s192 = scalar_select %p191, %s186, 24
          %s193 = smul.addr %s192, 8
          %s194 = scalar_lea.vmem %s0, %s193
          %s195 = smul.u32 16, %s14
          %s196 = ssub.s32 25, %s195
          %p197 = scmp.lt.s32.totalorder %s196, 16
          %s198 = scalar_select %p197, %s196, 16
          %s199 = smul.u32 8, %s198
        $region32: #{tpu_custom_call.1} parent=27 // pred_fallthru
          _
        // Predicated region
        $region33: #{tpu_custom_call.1} parent=27 // pred_check
          %p200 = pneg %p123
        $region34: #{tpu_custom_call.1} parent=27 // pred_check_branch
          %202 = sbr.rel (%p200) target = $region36
        $region35: #{tpu_custom_call.1} parent=27 // pred_region
          %s203 = sand.u32 %s113, 1
          %s204 = sand.u32 %s113, 1
          %s205 = smul.addr %s204, 32
          %s206 = scalar_lea.vmem [#allocation2], %s205
          %s207 = smul.addr %s14, 8
          %s208 = scalar_lea.vmem %s4, %s207
          // Predicated region
          $region37: #{tpu_custom_call.1} parent=35 // pred_check
            _
          $region38: #{tpu_custom_call.1} parent=35 // pred_check_branch
            %210 = sbr.rel (0) target = $region40
          $region39: #{tpu_custom_call.1} parent=35 // pred_region
            // Predicated region
            $region41: #{tpu_custom_call.1} parent=39 // pred_check
              _
            $region42: #{tpu_custom_call.1} parent=39 // pred_check_branch
              %212 = sbr.rel (0) target = $region44
            $region43: #{tpu_custom_call.1} parent=39 // pred_region
              // Predicated region
              $region56: #{tpu_custom_call.1} parent=43 // pred_check
                _
              $region57: #{tpu_custom_call.1} parent=43 // pred_check_branch
                %234 = sbr.rel (0) target = $region59
              $region58: #{tpu_custom_call.1} parent=43 // pred_region
                loop: start=0, step=1, limit=1
                $region60: #{tpu_custom_call.1} parent=58 // loop_pre_header
                  _
                $region61: #{tpu_custom_call.1} parent=58 // loop_header
                  %s236 = sphi 0, %s240
                  %p237 = scmp.ge.s32.totalorder %s236, 1
                  %s241 = sphi %s208, %s208
                  %s242 = sphi %s206, %s206
                $region62: #{tpu_custom_call.1} parent=58 // loop_header_branch
                  %239 = sbr.rel (%p237) target = $region66
                $region63: #{tpu_custom_call.1} parent=58 // loop_body
                  %v243 = vld [vmem:[%s241] sm:$0xff]
                  %244 = vst [vmem:[%s242] sm:$0xff] %v243
                  %v245 = vld [vmem:[%s241 + $0x10] sm:$0xff]
                  %246 = vst [vmem:[%s242 + $0x8] sm:$0xff] %v245
                  %v247 = vld [vmem:[%s241 + $0x20] sm:$0xff]
                  %248 = vst [vmem:[%s242 + $0x10] sm:$0xff] %v247
                  %v249 = vld [vmem:[%s241 + $0x30] sm:$0xff]
                  %250 = vst [vmem:[%s242 + $0x18] sm:$0xff] %v249
                $region64: #{tpu_custom_call.1} parent=58 // loop_footer
                  %s240 = sadd.s32 1, %s236
                $region65: #{tpu_custom_call.1} parent=58 // loop_footer_branch
                  %235 = sbr.rel target = $region61
                $region66: #{tpu_custom_call.1} parent=58 // loop_exit
                  _
              $region59: #{tpu_custom_call.1} parent=43 // pred_fallthru
                _
              // Predicated region
              $region67: #{tpu_custom_call.1} parent=43 // pred_check
                _
              $region68: #{tpu_custom_call.1} parent=43 // pred_check_branch
                %252 = sbr.rel target = $region70
              $region69: #{tpu_custom_call.1} parent=43 // pred_region
                _
              $region70: #{tpu_custom_call.1} parent=43 // pred_fallthru
                _
            $region44: #{tpu_custom_call.1} parent=39 // pred_fallthru
              _
            // Predicated region
            $region45: #{tpu_custom_call.1} parent=39 // pred_check
              _
            $region46: #{tpu_custom_call.1} parent=39 // pred_check_branch
              %214 = sbr.rel target = $region48
            $region47: #{tpu_custom_call.1} parent=39 // pred_region
              %s216 = ssub.s32 256, 1
              loop: start=0, step=1, limit=1
              $region49: #{tpu_custom_call.1} parent=47 // loop_pre_header
                _
              $region50: #{tpu_custom_call.1} parent=47 // loop_header
                %s218 = sphi 0, %s222
                %p219 = scmp.ge.s32.totalorder %s218, 1
                %s223 = sphi %s208, %s208
                %s224 = sphi %s206, %s206
              $region51: #{tpu_custom_call.1} parent=47 // loop_header_branch
                %221 = sbr.rel (%p219) target = $region55
              $region52: #{tpu_custom_call.1} parent=47 // loop_body
                %v225 = vld [vmem:[%s223] sm:%s216]
                %226 = vst [vmem:[%s224] sm:%s216] %v225
                %v227 = vld [vmem:[%s223 + $0x10] sm:%s216]
                %228 = vst [vmem:[%s224 + $0x8] sm:%s216] %v227
                %v229 = vld [vmem:[%s223 + $0x20] sm:%s216]
                %230 = vst [vmem:[%s224 + $0x10] sm:%s216] %v229
                %v231 = vld [vmem:[%s223 + $0x30] sm:%s216]
                %232 = vst [vmem:[%s224 + $0x18] sm:%s216] %v231
              $region53: #{tpu_custom_call.1} parent=47 // loop_footer
                %s222 = sadd.s32 1, %s218
              $region54: #{tpu_custom_call.1} parent=47 // loop_footer_branch
                %217 = sbr.rel target = $region50
              $region55: #{tpu_custom_call.1} parent=47 // loop_exit
                _
            $region48: #{tpu_custom_call.1} parent=39 // pred_fallthru
              _
          $region40: #{tpu_custom_call.1} parent=35 // pred_fallthru
            _
          %253 = vnop
        $region36: #{tpu_custom_call.1} parent=27 // pred_fallthru
          _
      $region28: #{tpu_custom_call.1} parent=5 // pred_fallthru
        _
      %p254 = scmp.le.s32.totalorder 1, %s14
      %p255 = scmp.lt.s32.totalorder %s14, 3
      %p256 = pnand %p254, %p255
      %p257 = pneg %p256
      // Predicated region
      $region71: #{tpu_custom_call.1} parent=5 // pred_check
        _
      $region72: #{tpu_custom_call.1} parent=5 // pred_check_branch
        %259 = sbr.rel (%p256) target = $region74
      $region73: #{tpu_custom_call.1} parent=5 // pred_region
        %s260 = ssub.s32 %s14, 1
        %s261 = sand.u32 %s116, 1
        %s262 = sand.u32 %s116, 1
        %s263 = smul.addr %s262, 32
        %s264 = scalar_lea.vmem [#allocation2], %s263
        // Predicated region
        $region75: #{tpu_custom_call.1} parent=73 // pred_check
          %p265 = pneg %p129
        $region76: #{tpu_custom_call.1} parent=73 // pred_check_branch
          %267 = sbr.rel (%p265) target = $region78
        $region77: #{tpu_custom_call.1} parent=73 // pred_region
          _
        $region78: #{tpu_custom_call.1} parent=73 // pred_fallthru
          _
        %s268 = smul.u32 16, %s19
        %s269 = ssub.s32 25, %s268
        %p270 = scmp.lt.s32.totalorder %s269, 16
        %s271 = scalar_select %p270, %s269, 16
        %s272 = smul.u32 8, %s271
        %p273 = scmp.lt.s32.totalorder %s268, 24
        %s274 = scalar_select %p273, %s268, 24
        %s275 = smul.addr %s274, 8
        %s276 = scalar_lea.vmem %s0, %s275
        %p277 = pneg %p40
        %p278 = pneg %p37
        %p279 = pneg %p61
        %p280 = pneg %p58
        %p281 = pneg %p82
        %p282 = pneg %p79
        %p283 = pneg %p103
        %p284 = pneg %p100
        %s285 = sand.u32 %s116, 1
        %s286 = sand.u32 %s116, 1
        %s287 = smul.addr %s286, 32
        %s288 = scalar_lea.vmem [#allocation2], %s287
        %p289 = pneg %p129
        %p290 = pneg %p126
        %p291 = pneg %p155
        %p292 = pneg %p152
        %s293 = sand.u32 %s142, 1
        %s294 = scalar_lea.sflag [#allocation4], %s293
        %s295 = sand.u32 %s142, 1
        %s296 = smul.addr %s295, 8
        %s297 = scalar_lea.vmem [#allocation3], %s296
        %s298 = smul.u32 16, %s19
        %s299 = ssub.s32 25, %s298
        %p300 = scmp.lt.s32.totalorder %s299, 16
        %s301 = scalar_select %p300, %s299, 16
        %s302 = smul.u32 8, %s301
        %p303 = scmp.lt.s32.totalorder %s298, 24
        %s304 = scalar_select %p303, %s298, 24
        %s305 = smul.addr %s304, 8
        %s306 = scalar_lea.vmem %s0, %s305
        %s307 = smul.u32 16, %s19
        %s308 = ssub.s32 25, %s307
        %p309 = scmp.lt.s32.totalorder %s308, 16
        %s310 = scalar_select %p309, %s308, 16
        %s311 = smul.u32 8, %s310
        %v312 = vld [vmem:[%s306] sm:$0xff]
        %v313 = vld [vmem:[%s306 + $0x8] sm:$0xff]
        %v314 = vld [vmem:[%s306 + $0x10] sm:$0xff]
        %v315 = vld [vmem:[%s306 + $0x18] sm:$0xff]
        %v316 = vld [vmem:[%s306 + $0x20] sm:$0xff]
        %v317 = vld [vmem:[%s306 + $0x28] sm:$0xff]
        %v318 = vld [vmem:[%s306 + $0x30] sm:$0xff]
        %v319 = vld [vmem:[%s306 + $0x38] sm:$0xff]
        %v320 = vld [vmem:[%s306 + $0x40] sm:$0xff]
        %v321 = vld [vmem:[%s306 + $0x48] sm:$0xff]
        %v322 = vld [vmem:[%s306 + $0x50] sm:$0xff]
        %v323 = vld [vmem:[%s306 + $0x58] sm:$0xff]
        %v324 = vld [vmem:[%s306 + $0x60] sm:$0xff]
        %v325 = vld [vmem:[%s306 + $0x68] sm:$0xff]
        %v326 = vld [vmem:[%s306 + $0x70] sm:$0xff]
        %v327 = vld [vmem:[%s306 + $0x78] sm:$0xff]
        %v328 = vld [vmem:[%s1] sm:$0xff]
        %v329 = vld [vmem:[%s1 + $0x8] sm:$0xff]
        %v330 = vld [vmem:[%s1 + $0x10] sm:$0xff]
        %v331 = vld [vmem:[%s1 + $0x18] sm:$0xff]
        %v332 = vld [vmem:[%s2] sm:$0xff]
        %v333 = vld [vmem:[%s3] sm:$0xff]
        %335 = vset.pattern.permute.xlu0 0
        %336 = vperm.xlu0 %335, %v333
        %v337 = vpop.permute.xlu0 %336
        %vm339 = vcmask 261120
        %v341 = vsel %vm339, %v332, 0
        %v344 = vsel %vm339, %v312, 0
        %v347 = vsel %vm339, %v313, 0
        %v350 = vsel %vm339, %v314, 0
        %v353 = vsel %vm339, %v315, 0
        %v356 = vsel %vm339, %v316, 0
        %v359 = vsel %vm339, %v317, 0
        %v362 = vsel %vm339, %v318, 0
        %v365 = vsel %vm339, %v319, 0
        %v368 = vsel %vm339, %v320, 0
        %v371 = vsel %vm339, %v321, 0
        %v374 = vsel %vm339, %v322, 0
        %v377 = vsel %vm339, %v323, 0
        %v380 = vsel %vm339, %v324, 0
        %v383 = vsel %vm339, %v325, 0
        %v386 = vsel %vm339, %v326, 0
        %v389 = vsel %vm339, %v327, 0
        %v391 = vand.u32 %v389, 4294901760
        %392 = vmatpush.xpose.msra.mxu0 %v391
        %v393 = vand.u32 %v386, 4294901760
        %394 = vmatpush.xpose.msra.mxu0 %v393
        %v395 = vand.u32 %v383, 4294901760
        %396 = vmatpush.xpose.msra.mxu0 %v395
        %v397 = vand.u32 %v380, 4294901760
        %398 = vmatpush.xpose.msra.mxu0 %v397
        %v399 = vand.u32 %v377, 4294901760
        %400 = vmatpush.xpose.msra.mxu0 %v399
        %v401 = vand.u32 %v374, 4294901760
        %402 = vmatpush.xpose.msra.mxu0 %v401
        %v403 = vand.u32 %v371, 4294901760
        %404 = vmatpush.xpose.msra.mxu0 %v403
        %v405 = vand.u32 %v368, 4294901760
        %406 = vmatpush.xpose.msra.mxu0 %v405
        %v407 = vand.u32 %v365, 4294901760
        %408 = vmatpush.xpose.msra.mxu0 %v407
        %v409 = vand.u32 %v362, 4294901760
        %410 = vmatpush.xpose.msra.mxu0 %v409
        %v411 = vand.u32 %v359, 4294901760
        %412 = vmatpush.xpose.msra.mxu0 %v411
        %v413 = vand.u32 %v356, 4294901760
        %414 = vmatpush.xpose.msra.mxu0 %v413
        %v415 = vand.u32 %v353, 4294901760
        %416 = vmatpush.xpose.msra.mxu0 %v415
        %v417 = vand.u32 %v350, 4294901760
        %418 = vmatpush.xpose.msra.mxu0 %v417
        %v419 = vand.u32 %v347, 4294901760
        %420 = vmatpush.xpose.msra.mxu0 %v419
        %v421 = vand.u32 %v344, 4294901760
        %422 = vmatpush.xpose.msra.mxu0 %v421
        %v423 = vand.u32 %v341, 4294901760
        %v424 = vsub.f32 %v341, %v423
        %v425 = vand.u32 %v424, 4294901760
        %v426 = vsub.f32 %v424, %v425
        %v427 = vand.u32 %v426, 4294901760
        %428 = vmatmul.f32.gmra.mxu0 %v427
        %v429 = vpop.f32.mrf.mxu0
        %v430 = vadd.f32 %v337, %v429
        %431 = vdwg.mxu0
        %v432 = vand.u32 %v389, 4294901760
        %v433 = vsub.f32 %v389, %v432
        %v434 = vand.u32 %v433, 4294901760
        %v435 = vsub.f32 %v433, %v434
        %v436 = vand.u32 %v435, 4294901760
        %437 = vmatpush.xpose.msra.mxu0 %v436
        %v438 = vand.u32 %v386, 4294901760
        %v439 = vsub.f32 %v386, %v438
        %v440 = vand.u32 %v439, 4294901760
        %v441 = vsub.f32 %v439, %v440
        %v442 = vand.u32 %v441, 4294901760
        %443 = vmatpush.xpose.msra.mxu0 %v442
        %v444 = vand.u32 %v383, 4294901760
        %v445 = vsub.f32 %v383, %v444
        %v446 = vand.u32 %v445, 4294901760
        %v447 = vsub.f32 %v445, %v446
        %v448 = vand.u32 %v447, 4294901760
        %449 = vmatpush.xpose.msra.mxu0 %v448
        %v450 = vand.u32 %v380, 4294901760
        %v451 = vsub.f32 %v380, %v450
        %v452 = vand.u32 %v451, 4294901760
        %v453 = vsub.f32 %v451, %v452
        %v454 = vand.u32 %v453, 4294901760
        %455 = vmatpush.xpose.msra.mxu0 %v454
        %v456 = vand.u32 %v377, 4294901760
        %v457 = vsub.f32 %v377, %v456
        %v458 = vand.u32 %v457, 4294901760
        %v459 = vsub.f32 %v457, %v458
        %v460 = vand.u32 %v459, 4294901760
        %461 = vmatpush.xpose.msra.mxu0 %v460
        %v462 = vand.u32 %v374, 4294901760
        %v463 = vsub.f32 %v374, %v462
        %v464 = vand.u32 %v463, 4294901760
        %v465 = vsub.f32 %v463, %v464
        %v466 = vand.u32 %v465, 4294901760
        %467 = vmatpush.xpose.msra.mxu0 %v466
        %v468 = vand.u32 %v371, 4294901760
        %v469 = vsub.f32 %v371, %v468
        %v470 = vand.u32 %v469, 4294901760
        %v471 = vsub.f32 %v469, %v470
        %v472 = vand.u32 %v471, 4294901760
        %473 = vmatpush.xpose.msra.mxu0 %v472
        %v474 = vand.u32 %v368, 4294901760
        %v475 = vsub.f32 %v368, %v474
        %v476 = vand.u32 %v475, 4294901760
        %v477 = vsub.f32 %v475, %v476
        %v478 = vand.u32 %v477, 4294901760
        %479 = vmatpush.xpose.msra.mxu0 %v478
        %v480 = vand.u32 %v365, 4294901760
        %v481 = vsub.f32 %v365, %v480
        %v482 = vand.u32 %v481, 4294901760
        %v483 = vsub.f32 %v481, %v482
        %v484 = vand.u32 %v483, 4294901760
        %485 = vmatpush.xpose.msra.mxu0 %v484
        %v486 = vand.u32 %v362, 4294901760
        %v487 = vsub.f32 %v362, %v486
        %v488 = vand.u32 %v487, 4294901760
        %v489 = vsub.f32 %v487, %v488
        %v490 = vand.u32 %v489, 4294901760
        %491 = vmatpush.xpose.msra.mxu0 %v490
        %v492 = vand.u32 %v359, 4294901760
        %v493 = vsub.f32 %v359, %v492
        %v494 = vand.u32 %v493, 4294901760
        %v495 = vsub.f32 %v493, %v494
        %v496 = vand.u32 %v495, 4294901760
        %497 = vmatpush.xpose.msra.mxu0 %v496
        %v498 = vand.u32 %v356, 4294901760
        %v499 = vsub.f32 %v356, %v498
        %v500 = vand.u32 %v499, 4294901760
        %v501 = vsub.f32 %v499, %v500
        %v502 = vand.u32 %v501, 4294901760
        %503 = vmatpush.xpose.msra.mxu0 %v502
        %v504 = vand.u32 %v353, 4294901760
        %v505 = vsub.f32 %v353, %v504
        %v506 = vand.u32 %v505, 4294901760
        %v507 = vsub.f32 %v505, %v506
        %v508 = vand.u32 %v507, 4294901760
        %509 = vmatpush.xpose.msra.mxu0 %v508
        %v510 = vand.u32 %v350, 4294901760
        %v511 = vsub.f32 %v350, %v510
        %v512 = vand.u32 %v511, 4294901760
        %v513 = vsub.f32 %v511, %v512
        %v514 = vand.u32 %v513, 4294901760
        %515 = vmatpush.xpose.msra.mxu0 %v514
        %v516 = vand.u32 %v347, 4294901760
        %v517 = vsub.f32 %v347, %v516
        %v518 = vand.u32 %v517, 4294901760
        %v519 = vsub.f32 %v517, %v518
        %v520 = vand.u32 %v519, 4294901760
        %521 = vmatpush.xpose.msra.mxu0 %v520
        %v522 = vand.u32 %v344, 4294901760
        %v523 = vsub.f32 %v344, %v522
        %v524 = vand.u32 %v523, 4294901760
        %v525 = vsub.f32 %v523, %v524
        %v526 = vand.u32 %v525, 4294901760
        %527 = vmatpush.xpose.msra.mxu0 %v526
        %v528 = vand.u32 %v341, 4294901760
        %529 = vmatmul.f32.gmra.mxu0 %v528
        %v530 = vpop.f32.mrf.mxu0
        %v531 = vadd.f32 %v430, %v530
        %532 = vdwg.mxu0
        %v533 = vand.u32 %v389, 4294901760
        %v534 = vsub.f32 %v389, %v533
        %535 = vmatpush.xpose.msra.mxu0 %v534
        %v536 = vand.u32 %v386, 4294901760
        %v537 = vsub.f32 %v386, %v536
        %538 = vmatpush.xpose.msra.mxu0 %v537
        %v539 = vand.u32 %v383, 4294901760
        %v540 = vsub.f32 %v383, %v539
        %541 = vmatpush.xpose.msra.mxu0 %v540
        %v542 = vand.u32 %v380, 4294901760
        %v543 = vsub.f32 %v380, %v542
        %544 = vmatpush.xpose.msra.mxu0 %v543
        %v545 = vand.u32 %v377, 4294901760
        %v546 = vsub.f32 %v377, %v545
        %547 = vmatpush.xpose.msra.mxu0 %v546
        %v548 = vand.u32 %v374, 4294901760
        %v549 = vsub.f32 %v374, %v548
        %550 = vmatpush.xpose.msra.mxu0 %v549
        %v551 = vand.u32 %v371, 4294901760
        %v552 = vsub.f32 %v371, %v551
        %553 = vmatpush.xpose.msra.mxu0 %v552
        %v554 = vand.u32 %v368, 4294901760
        %v555 = vsub.f32 %v368, %v554
        %556 = vmatpush.xpose.msra.mxu0 %v555
        %v557 = vand.u32 %v365, 4294901760
        %v558 = vsub.f32 %v365, %v557
        %559 = vmatpush.xpose.msra.mxu0 %v558
        %v560 = vand.u32 %v362, 4294901760
        %v561 = vsub.f32 %v362, %v560
        %562 = vmatpush.xpose.msra.mxu0 %v561
        %v563 = vand.u32 %v359, 4294901760
        %v564 = vsub.f32 %v359, %v563
        %565 = vmatpush.xpose.msra.mxu0 %v564
        %v566 = vand.u32 %v356, 4294901760
        %v567 = vsub.f32 %v356, %v566
        %568 = vmatpush.xpose.msra.mxu0 %v567
        %v569 = vand.u32 %v353, 4294901760
        %v570 = vsub.f32 %v353, %v569
        %571 = vmatpush.xpose.msra.mxu0 %v570
        %v572 = vand.u32 %v350, 4294901760
        %v573 = vsub.f32 %v350, %v572
        %574 = vmatpush.xpose.msra.mxu0 %v573
        %v575 = vand.u32 %v347, 4294901760
        %v576 = vsub.f32 %v347, %v575
        %577 = vmatpush.xpose.msra.mxu0 %v576
        %v578 = vand.u32 %v344, 4294901760
        %v579 = vsub.f32 %v344, %v578
        %580 = vmatpush.xpose.msra.mxu0 %v579
        %v581 = vand.u32 %v341, 4294901760
        %v582 = vsub.f32 %v341, %v581
        %583 = vmatmul.f32.gmra.mxu0 %v582
        %v584 = vpop.f32.mrf.mxu0
        %v585 = vadd.f32 %v531, %v584
        %586 = vdwg.mxu0
        %v587 = vand.u32 %v389, 4294901760
        %588 = vmatpush.xpose.msra.mxu0 %v587
        %v589 = vand.u32 %v386, 4294901760
        %590 = vmatpush.xpose.msra.mxu0 %v589
        %v591 = vand.u32 %v383, 4294901760
        %592 = vmatpush.xpose.msra.mxu0 %v591
        %v593 = vand.u32 %v380, 4294901760
        %594 = vmatpush.xpose.msra.mxu0 %v593
        %v595 = vand.u32 %v377, 4294901760
        %596 = vmatpush.xpose.msra.mxu0 %v595
        %v597 = vand.u32 %v374, 4294901760
        %598 = vmatpush.xpose.msra.mxu0 %v597
        %v599 = vand.u32 %v371, 4294901760
        %600 = vmatpush.xpose.msra.mxu0 %v599
        %v601 = vand.u32 %v368, 4294901760
        %602 = vmatpush.xpose.msra.mxu0 %v601
        %v603 = vand.u32 %v365, 4294901760
        %604 = vmatpush.xpose.msra.mxu0 %v603
        %v605 = vand.u32 %v362, 4294901760
        %606 = vmatpush.xpose.msra.mxu0 %v605
        %v607 = vand.u32 %v359, 4294901760
        %608 = vmatpush.xpose.msra.mxu0 %v607
        %v609 = vand.u32 %v356, 4294901760
        %610 = vmatpush.xpose.msra.mxu0 %v609
        %v611 = vand.u32 %v353, 4294901760
        %612 = vmatpush.xpose.msra.mxu0 %v611
        %v613 = vand.u32 %v350, 4294901760
        %614 = vmatpush.xpose.msra.mxu0 %v613
        %v615 = vand.u32 %v347, 4294901760
        %616 = vmatpush.xpose.msra.mxu0 %v615
        %v617 = vand.u32 %v344, 4294901760
        %618 = vmatpush.xpose.msra.mxu0 %v617
        %v619 = vand.u32 %v341, 4294901760
        %v620 = vsub.f32 %v341, %v619
        %v621 = vand.u32 %v620, 4294901760
        %622 = vmatmul.f32.gmra.mxu0 %v621
        %v623 = vpop.f32.mrf.mxu0
        %v624 = vadd.f32 %v585, %v623
        %625 = vdwg.mxu0
        %v626 = vand.u32 %v389, 4294901760
        %v627 = vsub.f32 %v389, %v626
        %v628 = vand.u32 %v627, 4294901760
        %629 = vmatpush.xpose.msra.mxu0 %v628
        %v630 = vand.u32 %v386, 4294901760
        %v631 = vsub.f32 %v386, %v630
        %v632 = vand.u32 %v631, 4294901760
        %633 = vmatpush.xpose.msra.mxu0 %v632
        %v634 = vand.u32 %v383, 4294901760
        %v635 = vsub.f32 %v383, %v634
        %v636 = vand.u32 %v635, 4294901760
        %637 = vmatpush.xpose.msra.mxu0 %v636
        %v638 = vand.u32 %v380, 4294901760
        %v639 = vsub.f32 %v380, %v638
        %v640 = vand.u32 %v639, 4294901760
        %641 = vmatpush.xpose.msra.mxu0 %v640
        %v642 = vand.u32 %v377, 4294901760
        %v643 = vsub.f32 %v377, %v642
        %v644 = vand.u32 %v643, 4294901760
        %645 = vmatpush.xpose.msra.mxu0 %v644
        %v646 = vand.u32 %v374, 4294901760
        %v647 = vsub.f32 %v374, %v646
        %v648 = vand.u32 %v647, 4294901760
        %649 = vmatpush.xpose.msra.mxu0 %v648
        %v650 = vand.u32 %v371, 4294901760
        %v651 = vsub.f32 %v371, %v650
        %v652 = vand.u32 %v651, 4294901760
        %653 = vmatpush.xpose.msra.mxu0 %v652
        %v654 = vand.u32 %v368, 4294901760
        %v655 = vsub.f32 %v368, %v654
        %v656 = vand.u32 %v655, 4294901760
        %657 = vmatpush.xpose.msra.mxu0 %v656
        %v658 = vand.u32 %v365, 4294901760
        %v659 = vsub.f32 %v365, %v658
        %v660 = vand.u32 %v659, 4294901760
        %661 = vmatpush.xpose.msra.mxu0 %v660
        %v662 = vand.u32 %v362, 4294901760
        %v663 = vsub.f32 %v362, %v662
        %v664 = vand.u32 %v663, 4294901760
        %665 = vmatpush.xpose.msra.mxu0 %v664
        %v666 = vand.u32 %v359, 4294901760
        %v667 = vsub.f32 %v359, %v666
        %v668 = vand.u32 %v667, 4294901760
        %669 = vmatpush.xpose.msra.mxu0 %v668
        %v670 = vand.u32 %v356, 4294901760
        %v671 = vsub.f32 %v356, %v670
        %v672 = vand.u32 %v671, 4294901760
        %673 = vmatpush.xpose.msra.mxu0 %v672
        %v674 = vand.u32 %v353, 4294901760
        %v675 = vsub.f32 %v353, %v674
        %v676 = vand.u32 %v675, 4294901760
        %677 = vmatpush.xpose.msra.mxu0 %v676
        %v678 = vand.u32 %v350, 4294901760
        %v679 = vsub.f32 %v350, %v678
        %v680 = vand.u32 %v679, 4294901760
        %681 = vmatpush.xpose.msra.mxu0 %v680
        %v682 = vand.u32 %v347, 4294901760
        %v683 = vsub.f32 %v347, %v682
        %v684 = vand.u32 %v683, 4294901760
        %685 = vmatpush.xpose.msra.mxu0 %v684
        %v686 = vand.u32 %v344, 4294901760
        %v687 = vsub.f32 %v344, %v686
        %v688 = vand.u32 %v687, 4294901760
        %689 = vmatpush.xpose.msra.mxu0 %v688
        %v690 = vand.u32 %v341, 4294901760
        %691 = vmatmul.f32.gmra.mxu0 %v690
        %v692 = vpop.f32.mrf.mxu0
        %v693 = vadd.f32 %v624, %v692
        %694 = vdwg.mxu0
        %v695 = vand.u32 %v389, 4294901760
        %696 = vmatpush.xpose.msra.mxu0 %v695
        %v697 = vand.u32 %v386, 4294901760
        %698 = vmatpush.xpose.msra.mxu0 %v697
        %v699 = vand.u32 %v383, 4294901760
        %700 = vmatpush.xpose.msra.mxu0 %v699
        %v701 = vand.u32 %v380, 4294901760
        %702 = vmatpush.xpose.msra.mxu0 %v701
        %v703 = vand.u32 %v377, 4294901760
        %704 = vmatpush.xpose.msra.mxu0 %v703
        %v705 = vand.u32 %v374, 4294901760
        %706 = vmatpush.xpose.msra.mxu0 %v705
        %v707 = vand.u32 %v371, 4294901760
        %708 = vmatpush.xpose.msra.mxu0 %v707
        %v709 = vand.u32 %v368, 4294901760
        %710 = vmatpush.xpose.msra.mxu0 %v709
        %v711 = vand.u32 %v365, 4294901760
        %712 = vmatpush.xpose.msra.mxu0 %v711
        %v713 = vand.u32 %v362, 4294901760
        %714 = vmatpush.xpose.msra.mxu0 %v713
        %v715 = vand.u32 %v359, 4294901760
        %716 = vmatpush.xpose.msra.mxu0 %v715
        %v717 = vand.u32 %v356, 4294901760
        %718 = vmatpush.xpose.msra.mxu0 %v717
        %v719 = vand.u32 %v353, 4294901760
        %720 = vmatpush.xpose.msra.mxu0 %v719
        %v721 = vand.u32 %v350, 4294901760
        %722 = vmatpush.xpose.msra.mxu0 %v721
        %v723 = vand.u32 %v347, 4294901760
        %724 = vmatpush.xpose.msra.mxu0 %v723
        %v725 = vand.u32 %v344, 4294901760
        %726 = vmatpush.xpose.msra.mxu0 %v725
        %v727 = vand.u32 %v341, 4294901760
        %728 = vmatmul.f32.gmra.mxu0 %v727
        %v729 = vpop.f32.mrf.mxu0
        %v730 = vadd.f32 %v693, %v729
        %731 = vdwg.mxu0
        %v732 = vlaneseq
        %v733 = vshrl.u32 %v732, 7
        %v734 = vrot.slane %v730, 4
        %v735 = vmax.f32 %v730, %v734
        %v736 = vrot.slane %v735, 2
        %v737 = vmax.f32 %v735, %v736
        %v738 = vrot.slane %v737, 1
        %v739 = vmax.f32 %v737, %v738
        %vm740 = vcmp.eq.f32.partialorder %v730, %v739
        %v741 = vsel %vm740, %v733, 8
        %v742 = vrot.slane %v741, 4
        %vm743 = vcmp.lt.s32.totalorder %v741, %v742
        %v744 = vsel %vm743, %v741, %v742
        %v745 = vrot.slane %v744, 2
        %vm746 = vcmp.lt.s32.totalorder %v744, %v745
        %v747 = vsel %vm746, %v744, %v745
        %v748 = vrot.slane %v747, 1
        %vm749 = vcmp.lt.s32.totalorder %v747, %v748
        %v750 = vsel %vm749, %v747, %v748
        %vm751 = vcmp.eq.s32.totalorder %v733, %v750
        %v752 = vsel %vm751, 1, 0
        %v753 = vcvt.s32.f32 %v752
        %v754 = vld [vmem:[%s264] sm:$0xff]
        %v755 = vld [vmem:[%s264 + $0x8] sm:$0xff]
        %v756 = vld [vmem:[%s264 + $0x10] sm:$0xff]
        %v757 = vld [vmem:[%s264 + $0x18] sm:$0xff]
        %v758 = vmul.f32 %v754, %v754
        %v759 = vmul.f32 %v755, %v755
        %v760 = vmul.f32 %v756, %v756
        %v761 = vmul.f32 %v757, %v757
        %v762 = vadd.f32 %v758, %v759
        %v763 = vadd.f32 %v762, %v760
        %v764 = vadd.f32 %v763, %v761
        %v765 = vrot.slane %v764, 4
        %v766 = vadd.f32 %v764, %v765
        %v767 = vrot.slane %v766, 2
        %v768 = vadd.f32 %v766, %v767
        %v769 = vrot.slane %v768, 1
        %v770 = vadd.f32 %v768, %v769
        %v771 = vrsqrt.pop %v770
        %v772 = vmul.f32 %v771, %v770
        %v773 = vmul.f32 %v772, %v771
        %v774 = vmul.f32 0.5, %v773
        %v775 = vsub.f32 1.5, %v774
        %v776 = vmul.f32 %v771, %v775
        %v777 = vmul.f32 %v770, %v776
        %vm778 = vcmp.eq.f32.partialorder %v770, inf
        %v779 = vsel %vm778, %v770, %v777
        %vm780 = vcmp.eq.f32.partialorder %v770, 0.0
        %v781 = vand.u32 %v770, 2147483648
        %v782 = vsel %vm780, %v781, %v779
        %v783 = vadd.f32 %v782, 1e-08
        %v784 = vrcp.pop %v783
        %v785 = vmul.f32 %v783, %v784
        %v786 = vsub.f32 1.0, %v785
        %v787 = vmul.f32 %v784, %v786
        %v788 = vadd.f32 %v784, %v787
        %vm789 = vweird.f32 %v783
        %vm790 = vweird.f32 %v784
        %vm791 = vmor %vm789, %vm790
        %v792 = vsel %vm791, %v784, %v788
        %v793 = vand.u32 2147483647, %v783
        %vm794 = vcmp.eq.f32.partialorder %v793, 8.507059e+37
        %v795 = vand.u32 %v783, 2147483648
        %v796 = vor.u32 1.1754944e-38, %v795
        %v797 = vsel %vm794, %v796, %v792
        %v798 = vmul.f32 %v754, %v797
        %v799 = vmul.f32 %v755, %v797
        %v800 = vmul.f32 %v756, %v797
        %v801 = vmul.f32 %v757, %v797
        %802 = vmatpush.msra.mxu0 0.0
        %803 = vmatpush.msra.mxu0 0.0
        %804 = vmatpush.msra.mxu0 0.0
        %805 = vmatpush.msra.mxu0 0.0
        %806 = vmatpush.msra.mxu0 0.0
        %807 = vmatpush.msra.mxu0 0.0
        %808 = vmatpush.msra.mxu0 0.0
        %809 = vmatpush.msra.mxu0 0.0
        %810 = vmatpush.msra.mxu0 0.0
        %811 = vmatpush.msra.mxu0 0.0
        %812 = vmatpush.msra.mxu0 0.0
        %813 = vmatpush.msra.mxu0 0.0
        %v814 = vand.u32 %v801, 4294901760
        %815 = vmatpush.msra.mxu0 %v814
        %v816 = vand.u32 %v800, 4294901760
        %817 = vmatpush.msra.mxu0 %v816
        %v818 = vand.u32 %v799, 4294901760
        %819 = vmatpush.msra.mxu0 %v818
        %v820 = vand.u32 %v798, 4294901760
        %821 = vmatpush.msra.mxu0 %v820
        %v822 = vand.u32 %v341, 4294901760
        %v823 = vsub.f32 %v341, %v822
        %v824 = vand.u32 %v823, 4294901760
        %v825 = vsub.f32 %v823, %v824
        %v826 = vand.u32 %v825, 4294901760
        %827 = vmatmul.f32.gmra.mxu0 %v826
        %v828 = vpop.f32.mrf.mxu0
        %v829 = vadd.f32 0.0, %v828
        %830 = vdwg.mxu0
        %831 = vmatpush.msra.mxu0 0.0
        %832 = vmatpush.msra.mxu0 0.0
        %833 = vmatpush.msra.mxu0 0.0
        %834 = vmatpush.msra.mxu0 0.0
        %835 = vmatpush.msra.mxu0 0.0
        %836 = vmatpush.msra.mxu0 0.0
        %837 = vmatpush.msra.mxu0 0.0
        %838 = vmatpush.msra.mxu0 0.0
        %839 = vmatpush.msra.mxu0 0.0
        %840 = vmatpush.msra.mxu0 0.0
        %841 = vmatpush.msra.mxu0 0.0
        %842 = vmatpush.msra.mxu0 0.0
        %v843 = vand.u32 %v801, 4294901760
        %v844 = vsub.f32 %v801, %v843
        %v845 = vand.u32 %v844, 4294901760
        %v846 = vsub.f32 %v844, %v845
        %v847 = vand.u32 %v846, 4294901760
        %848 = vmatpush.msra.mxu0 %v847
        %v849 = vand.u32 %v800, 4294901760
        %v850 = vsub.f32 %v800, %v849
        %v851 = vand.u32 %v850, 4294901760
        %v852 = vsub.f32 %v850, %v851
        %v853 = vand.u32 %v852, 4294901760
        %854 = vmatpush.msra.mxu0 %v853
        %v855 = vand.u32 %v799, 4294901760
        %v856 = vsub.f32 %v799, %v855
        %v857 = vand.u32 %v856, 4294901760
        %v858 = vsub.f32 %v856, %v857
        %v859 = vand.u32 %v858, 4294901760
        %860 = vmatpush.msra.mxu0 %v859
        %v861 = vand.u32 %v798, 4294901760
        %v862 = vsub.f32 %v798, %v861
        %v863 = vand.u32 %v862, 4294901760
        %v864 = vsub.f32 %v862, %v863
        %v865 = vand.u32 %v864, 4294901760
        %866 = vmatpush.msra.mxu0 %v865
        %v867 = vand.u32 %v341, 4294901760
        %868 = vmatmul.f32.gmra.mxu0 %v867
        %v869 = vpop.f32.mrf.mxu0
        %v870 = vadd.f32 %v829, %v869
        %871 = vdwg.mxu0
        %872 = vmatpush.msra.mxu0 0.0
        %873 = vmatpush.msra.mxu0 0.0
        %874 = vmatpush.msra.mxu0 0.0
        %875 = vmatpush.msra.mxu0 0.0
        %876 = vmatpush.msra.mxu0 0.0
        %877 = vmatpush.msra.mxu0 0.0
        %878 = vmatpush.msra.mxu0 0.0
        %879 = vmatpush.msra.mxu0 0.0
        %880 = vmatpush.msra.mxu0 0.0
        %881 = vmatpush.msra.mxu0 0.0
        %882 = vmatpush.msra.mxu0 0.0
        %883 = vmatpush.msra.mxu0 0.0
        %v884 = vand.u32 %v801, 4294901760
        %v885 = vsub.f32 %v801, %v884
        %886 = vmatpush.msra.mxu0 %v885
        %v887 = vand.u32 %v800, 4294901760
        %v888 = vsub.f32 %v800, %v887
        %889 = vmatpush.msra.mxu0 %v888
        %v890 = vand.u32 %v799, 4294901760
        %v891 = vsub.f32 %v799, %v890
        %892 = vmatpush.msra.mxu0 %v891
        %v893 = vand.u32 %v798, 4294901760
        %v894 = vsub.f32 %v798, %v893
        %895 = vmatpush.msra.mxu0 %v894
        %v896 = vand.u32 %v341, 4294901760
        %v897 = vsub.f32 %v341, %v896
        %898 = vmatmul.f32.gmra.mxu0 %v897
        %v899 = vpop.f32.mrf.mxu0
        %v900 = vadd.f32 %v870, %v899
        %901 = vdwg.mxu0
        %902 = vmatpush.msra.mxu0 0.0
        %903 = vmatpush.msra.mxu0 0.0
        %904 = vmatpush.msra.mxu0 0.0
        %905 = vmatpush.msra.mxu0 0.0
        %906 = vmatpush.msra.mxu0 0.0
        %907 = vmatpush.msra.mxu0 0.0
        %908 = vmatpush.msra.mxu0 0.0
        %909 = vmatpush.msra.mxu0 0.0
        %910 = vmatpush.msra.mxu0 0.0
        %911 = vmatpush.msra.mxu0 0.0
        %912 = vmatpush.msra.mxu0 0.0
        %913 = vmatpush.msra.mxu0 0.0
        %v914 = vand.u32 %v801, 4294901760
        %915 = vmatpush.msra.mxu0 %v914
        %v916 = vand.u32 %v800, 4294901760
        %917 = vmatpush.msra.mxu0 %v916
        %v918 = vand.u32 %v799, 4294901760
        %919 = vmatpush.msra.mxu0 %v918
        %v920 = vand.u32 %v798, 4294901760
        %921 = vmatpush.msra.mxu0 %v920
        %v922 = vand.u32 %v341, 4294901760
        %v923 = vsub.f32 %v341, %v922
        %v924 = vand.u32 %v923, 4294901760
        %925 = vmatmul.f32.gmra.mxu0 %v924
        %v926 = vpop.f32.mrf.mxu0
        %v927 = vadd.f32 %v900, %v926
        %928 = vdwg.mxu0
        %929 = vmatpush.msra.mxu0 0.0
        %930 = vmatpush.msra.mxu0 0.0
        %931 = vmatpush.msra.mxu0 0.0
        %932 = vmatpush.msra.mxu0 0.0
        %933 = vmatpush.msra.mxu0 0.0
        %934 = vmatpush.msra.mxu0 0.0
        %935 = vmatpush.msra.mxu0 0.0
        %936 = vmatpush.msra.mxu0 0.0
        %937 = vmatpush.msra.mxu0 0.0
        %938 = vmatpush.msra.mxu0 0.0
        %939 = vmatpush.msra.mxu0 0.0
        %940 = vmatpush.msra.mxu0 0.0
        %v941 = vand.u32 %v801, 4294901760
        %v942 = vsub.f32 %v801, %v941
        %v943 = vand.u32 %v942, 4294901760
        %944 = vmatpush.msra.mxu0 %v943
        %v945 = vand.u32 %v800, 4294901760
        %v946 = vsub.f32 %v800, %v945
        %v947 = vand.u32 %v946, 4294901760
        %948 = vmatpush.msra.mxu0 %v947
        %v949 = vand.u32 %v799, 4294901760
        %v950 = vsub.f32 %v799, %v949
        %v951 = vand.u32 %v950, 4294901760
        %952 = vmatpush.msra.mxu0 %v951
        %v953 = vand.u32 %v798, 4294901760
        %v954 = vsub.f32 %v798, %v953
        %v955 = vand.u32 %v954, 4294901760
        %956 = vmatpush.msra.mxu0 %v955
        %v957 = vand.u32 %v341, 4294901760
        %958 = vmatmul.f32.gmra.mxu0 %v957
        %v959 = vpop.f32.mrf.mxu0
        %v960 = vadd.f32 %v927, %v959
        %961 = vdwg.mxu0
        %962 = vmatpush.msra.mxu0 0.0
        %963 = vmatpush.msra.mxu0 0.0
        %964 = vmatpush.msra.mxu0 0.0
        %965 = vmatpush.msra.mxu0 0.0
        %966 = vmatpush.msra.mxu0 0.0
        %967 = vmatpush.msra.mxu0 0.0
        %968 = vmatpush.msra.mxu0 0.0
        %969 = vmatpush.msra.mxu0 0.0
        %970 = vmatpush.msra.mxu0 0.0
        %971 = vmatpush.msra.mxu0 0.0
        %972 = vmatpush.msra.mxu0 0.0
        %973 = vmatpush.msra.mxu0 0.0
        %v974 = vand.u32 %v801, 4294901760
        %975 = vmatpush.msra.mxu0 %v974
        %v976 = vand.u32 %v800, 4294901760
        %977 = vmatpush.msra.mxu0 %v976
        %v978 = vand.u32 %v799, 4294901760
        %979 = vmatpush.msra.mxu0 %v978
        %v980 = vand.u32 %v798, 4294901760
        %981 = vmatpush.msra.mxu0 %v980
        %v982 = vand.u32 %v341, 4294901760
        %983 = vmatmul.f32.gmra.mxu0 %v982
        %v984 = vpop.f32.mrf.mxu0
        %v985 = vadd.f32 %v960, %v984
        %986 = vdwg.mxu0
        %v987 = vmul.f32 %v985, 0.001
        %v988 = vadd.f32 %v730, %v987
        %v989 = vrot.slane %v988, 4
        %v990 = vmax.f32 %v988, %v989
        %v991 = vrot.slane %v990, 2
        %v992 = vmax.f32 %v990, %v991
        %v993 = vrot.slane %v992, 1
        %v994 = vmax.f32 %v992, %v993
        %v995 = vsub.f32 %v988, %v994
        %v996 = vmul.f32 %v995, 1.442695
        %v997 = vpow.pop %v996
        %v998 = vrot.slane %v997, 4
        %v999 = vadd.f32 %v997, %v998
        %v1000 = vrot.slane %v999, 2
        %v1001 = vadd.f32 %v999, %v1000
        %v1002 = vrot.slane %v1001, 1
        %v1003 = vadd.f32 %v1001, %v1002
        %v1004 = vrcp.pop %v1003
        %v1005 = vmul.f32 %v1003, %v1004
        %v1006 = vsub.f32 1.0, %v1005
        %v1007 = vmul.f32 %v1004, %v1006
        %v1008 = vadd.f32 %v1004, %v1007
        %vm1009 = vweird.f32 %v1003
        %vm1010 = vweird.f32 %v1004
        %vm1011 = vmor %vm1009, %vm1010
        %v1012 = vsel %vm1011, %v1004, %v1008
        %v1013 = vand.u32 2147483647, %v1003
        %vm1014 = vcmp.eq.f32.partialorder %v1013, 8.507059e+37
        %v1015 = vand.u32 %v1003, 2147483648
        %v1016 = vor.u32 1.1754944e-38, %v1015
        %v1017 = vsel %vm1014, %v1016, %v1012
        %v1018 = vmul.f32 %v997, %v1017
        %v1019 = vsub.f32 %v1018, %v753
        %vm1020 = vcmask 64512
        %v1022 = vsel %vm1020, %v328, 0
        %v1025 = vsel %vm1020, %v329, 0
        %v1028 = vsel %vm1020, %v330, 0
        %v1031 = vsel %vm1020, %v331, 0
        %1033 = vmatpush.msra.mxu0 0.0
        %1034 = vmatpush.msra.mxu0 0.0
        %1035 = vmatpush.msra.mxu0 0.0
        %1036 = vmatpush.msra.mxu0 0.0
        %1037 = vmatpush.msra.mxu0 0.0
        %1038 = vmatpush.msra.mxu0 0.0
        %1039 = vmatpush.msra.mxu0 0.0
        %1040 = vmatpush.msra.mxu0 0.0
        %1041 = vmatpush.msra.mxu0 0.0
        %1042 = vmatpush.msra.mxu0 0.0
        %1043 = vmatpush.msra.mxu0 0.0
        %1044 = vmatpush.msra.mxu0 0.0
        %1045 = vmatpush.msra.mxu0 0.0
        %1046 = vmatpush.msra.mxu0 0.0
        %1047 = vmatpush.msra.mxu0 0.0
        %v1048 = vand.u32 %v1019, 4294901760
        %1049 = vmatpush.msra.mxu0 %v1048
        %v1050 = vand.u32 %v1022, 4294901760
        %v1051 = vsub.f32 %v1022, %v1050
        %v1052 = vand.u32 %v1051, 4294901760
        %v1053 = vsub.f32 %v1051, %v1052
        %v1054 = vand.u32 %v1053, 4294901760
        %1055 = vmatmul.f32.gmra.mxu0 %v1054
        %v1056 = vpop.f32.mrf.mxu0
        %v1057 = vadd.f32 0.0, %v1056
        %v1058 = vand.u32 %v1025, 4294901760
        %v1059 = vsub.f32 %v1025, %v1058
        %v1060 = vand.u32 %v1059, 4294901760
        %v1061 = vsub.f32 %v1059, %v1060
        %v1062 = vand.u32 %v1061, 4294901760
        %1063 = vmatmul.f32.gmra.mxu0 %v1062
        %v1064 = vpop.f32.mrf.mxu0
        %v1065 = vadd.f32 0.0, %v1064
        %v1066 = vand.u32 %v1028, 4294901760
        %v1067 = vsub.f32 %v1028, %v1066
        %v1068 = vand.u32 %v1067, 4294901760
        %v1069 = vsub.f32 %v1067, %v1068
        %v1070 = vand.u32 %v1069, 4294901760
        %1071 = vmatmul.f32.gmra.mxu0 %v1070
        %v1072 = vpop.f32.mrf.mxu0
        %v1073 = vadd.f32 0.0, %v1072
        %v1074 = vand.u32 %v1031, 4294901760
        %v1075 = vsub.f32 %v1031, %v1074
        %v1076 = vand.u32 %v1075, 4294901760
        %v1077 = vsub.f32 %v1075, %v1076
        %v1078 = vand.u32 %v1077, 4294901760
        %1079 = vmatmul.f32.gmra.mxu0 %v1078
        %v1080 = vpop.f32.mrf.mxu0
        %v1081 = vadd.f32 0.0, %v1080
        %1082 = vdwg.mxu0
        %1083 = vmatpush.msra.mxu0 0.0
        %1084 = vmatpush.msra.mxu0 0.0
        %1085 = vmatpush.msra.mxu0 0.0
        %1086 = vmatpush.msra.mxu0 0.0
        %1087 = vmatpush.msra.mxu0 0.0
        %1088 = vmatpush.msra.mxu0 0.0
        %1089 = vmatpush.msra.mxu0 0.0
        %1090 = vmatpush.msra.mxu0 0.0
        %1091 = vmatpush.msra.mxu0 0.0
        %1092 = vmatpush.msra.mxu0 0.0
        %1093 = vmatpush.msra.mxu0 0.0
        %1094 = vmatpush.msra.mxu0 0.0
        %1095 = vmatpush.msra.mxu0 0.0
        %1096 = vmatpush.msra.mxu0 0.0
        %1097 = vmatpush.msra.mxu0 0.0
        %v1098 = vand.u32 %v1019, 4294901760
        %v1099 = vsub.f32 %v1019, %v1098
        %v1100 = vand.u32 %v1099, 4294901760
        %v1101 = vsub.f32 %v1099, %v1100
        %v1102 = vand.u32 %v1101, 4294901760
        %1103 = vmatpush.msra.mxu0 %v1102
        %v1104 = vand.u32 %v1022, 4294901760
        %1105 = vmatmul.f32.gmra.mxu0 %v1104
        %v1106 = vpop.f32.mrf.mxu0
        %v1107 = vadd.f32 %v1057, %v1106
        %v1108 = vand.u32 %v1025, 4294901760
        %1109 = vmatmul.f32.gmra.mxu0 %v1108
        %v1110 = vpop.f32.mrf.mxu0
        %v1111 = vadd.f32 %v1065, %v1110
        %v1112 = vand.u32 %v1028, 4294901760
        %1113 = vmatmul.f32.gmra.mxu0 %v1112
        %v1114 = vpop.f32.mrf.mxu0
        %v1115 = vadd.f32 %v1073, %v1114
        %v1116 = vand.u32 %v1031, 4294901760
        %1117 = vmatmul.f32.gmra.mxu0 %v1116
        %v1118 = vpop.f32.mrf.mxu0
        %v1119 = vadd.f32 %v1081, %v1118
        %1120 = vdwg.mxu0
        %1121 = vmatpush.msra.mxu0 0.0
        %1122 = vmatpush.msra.mxu0 0.0
        %1123 = vmatpush.msra.mxu0 0.0
        %1124 = vmatpush.msra.mxu0 0.0
        %1125 = vmatpush.msra.mxu0 0.0
        %1126 = vmatpush.msra.mxu0 0.0
        %1127 = vmatpush.msra.mxu0 0.0
        %1128 = vmatpush.msra.mxu0 0.0
        %1129 = vmatpush.msra.mxu0 0.0
        %1130 = vmatpush.msra.mxu0 0.0
        %1131 = vmatpush.msra.mxu0 0.0
        %1132 = vmatpush.msra.mxu0 0.0
        %1133 = vmatpush.msra.mxu0 0.0
        %1134 = vmatpush.msra.mxu0 0.0
        %1135 = vmatpush.msra.mxu0 0.0
        %v1136 = vand.u32 %v1019, 4294901760
        %v1137 = vsub.f32 %v1019, %v1136
        %1138 = vmatpush.msra.mxu0 %v1137
        %v1139 = vand.u32 %v1022, 4294901760
        %v1140 = vsub.f32 %v1022, %v1139
        %1141 = vmatmul.f32.gmra.mxu0 %v1140
        %v1142 = vpop.f32.mrf.mxu0
        %v1143 = vadd.f32 %v1107, %v1142
        %v1144 = vand.u32 %v1025, 4294901760
        %v1145 = vsub.f32 %v1025, %v1144
        %1146 = vmatmul.f32.gmra.mxu0 %v1145
        %v1147 = vpop.f32.mrf.mxu0
        %v1148 = vadd.f32 %v1111, %v1147
        %v1149 = vand.u32 %v1028, 4294901760
        %v1150 = vsub.f32 %v1028, %v1149
        %1151 = vmatmul.f32.gmra.mxu0 %v1150
        %v1152 = vpop.f32.mrf.mxu0
        %v1153 = vadd.f32 %v1115, %v1152
        %v1154 = vand.u32 %v1031, 4294901760
        %v1155 = vsub.f32 %v1031, %v1154
        %1156 = vmatmul.f32.gmra.mxu0 %v1155
        %v1157 = vpop.f32.mrf.mxu0
        %v1158 = vadd.f32 %v1119, %v1157
        %1159 = vdwg.mxu0
        %1160 = vmatpush.msra.mxu0 0.0
        %1161 = vmatpush.msra.mxu0 0.0
        %1162 = vmatpush.msra.mxu0 0.0
        %1163 = vmatpush.msra.mxu0 0.0
        %1164 = vmatpush.msra.mxu0 0.0
        %1165 = vmatpush.msra.mxu0 0.0
        %1166 = vmatpush.msra.mxu0 0.0
        %1167 = vmatpush.msra.mxu0 0.0
        %1168 = vmatpush.msra.mxu0 0.0
        %1169 = vmatpush.msra.mxu0 0.0
        %1170 = vmatpush.msra.mxu0 0.0
        %1171 = vmatpush.msra.mxu0 0.0
        %1172 = vmatpush.msra.mxu0 0.0
        %1173 = vmatpush.msra.mxu0 0.0
        %1174 = vmatpush.msra.mxu0 0.0
        %v1175 = vand.u32 %v1019, 4294901760
        %1176 = vmatpush.msra.mxu0 %v1175
        %v1177 = vand.u32 %v1022, 4294901760
        %v1178 = vsub.f32 %v1022, %v1177
        %v1179 = vand.u32 %v1178, 4294901760
        %1180 = vmatmul.f32.gmra.mxu0 %v1179
        %v1181 = vpop.f32.mrf.mxu0
        %v1182 = vadd.f32 %v1143, %v1181
        %v1183 = vand.u32 %v1025, 4294901760
        %v1184 = vsub.f32 %v1025, %v1183
        %v1185 = vand.u32 %v1184, 4294901760
        %1186 = vmatmul.f32.gmra.mxu0 %v1185
        %v1187 = vpop.f32.mrf.mxu0
        %v1188 = vadd.f32 %v1148, %v1187
        %v1189 = vand.u32 %v1028, 4294901760
        %v1190 = vsub.f32 %v1028, %v1189
        %v1191 = vand.u32 %v1190, 4294901760
        %1192 = vmatmul.f32.gmra.mxu0 %v1191
        %v1193 = vpop.f32.mrf.mxu0
        %v1194 = vadd.f32 %v1153, %v1193
        %v1195 = vand.u32 %v1031, 4294901760
        %v1196 = vsub.f32 %v1031, %v1195
        %v1197 = vand.u32 %v1196, 4294901760
        %1198 = vmatmul.f32.gmra.mxu0 %v1197
        %v1199 = vpop.f32.mrf.mxu0
        %v1200 = vadd.f32 %v1158, %v1199
        %1201 = vdwg.mxu0
        %1202 = vmatpush.msra.mxu0 0.0
        %1203 = vmatpush.msra.mxu0 0.0
        %1204 = vmatpush.msra.mxu0 0.0
        %1205 = vmatpush.msra.mxu0 0.0
        %1206 = vmatpush.msra.mxu0 0.0
        %1207 = vmatpush.msra.mxu0 0.0
        %1208 = vmatpush.msra.mxu0 0.0
        %1209 = vmatpush.msra.mxu0 0.0
        %1210 = vmatpush.msra.mxu0 0.0
        %1211 = vmatpush.msra.mxu0 0.0
        %1212 = vmatpush.msra.mxu0 0.0
        %1213 = vmatpush.msra.mxu0 0.0
        %1214 = vmatpush.msra.mxu0 0.0
        %1215 = vmatpush.msra.mxu0 0.0
        %1216 = vmatpush.msra.mxu0 0.0
        %v1217 = vand.u32 %v1019, 4294901760
        %v1218 = vsub.f32 %v1019, %v1217
        %v1219 = vand.u32 %v1218, 4294901760
        %1220 = vmatpush.msra.mxu0 %v1219
        %v1221 = vand.u32 %v1022, 4294901760
        %1222 = vmatmul.f32.gmra.mxu0 %v1221
        %v1223 = vpop.f32.mrf.mxu0
        %v1224 = vadd.f32 %v1182, %v1223
        %v1225 = vand.u32 %v1025, 4294901760
        %1226 = vmatmul.f32.gmra.mxu0 %v1225
        %v1227 = vpop.f32.mrf.mxu0
        %v1228 = vadd.f32 %v1188, %v1227
        %v1229 = vand.u32 %v1028, 4294901760
        %1230 = vmatmul.f32.gmra.mxu0 %v1229
        %v1231 = vpop.f32.mrf.mxu0
        %v1232 = vadd.f32 %v1194, %v1231
        %v1233 = vand.u32 %v1031, 4294901760
        %1234 = vmatmul.f32.gmra.mxu0 %v1233
        %v1235 = vpop.f32.mrf.mxu0
        %v1236 = vadd.f32 %v1200, %v1235
        %1237 = vdwg.mxu0
        %1238 = vmatpush.msra.mxu0 0.0
        %1239 = vmatpush.msra.mxu0 0.0
        %1240 = vmatpush.msra.mxu0 0.0
        %1241 = vmatpush.msra.mxu0 0.0
        %1242 = vmatpush.msra.mxu0 0.0
        %1243 = vmatpush.msra.mxu0 0.0
        %1244 = vmatpush.msra.mxu0 0.0
        %1245 = vmatpush.msra.mxu0 0.0
        %1246 = vmatpush.msra.mxu0 0.0
        %1247 = vmatpush.msra.mxu0 0.0
        %1248 = vmatpush.msra.mxu0 0.0
        %1249 = vmatpush.msra.mxu0 0.0
        %1250 = vmatpush.msra.mxu0 0.0
        %1251 = vmatpush.msra.mxu0 0.0
        %1252 = vmatpush.msra.mxu0 0.0
        %v1253 = vand.u32 %v1019, 4294901760
        %1254 = vmatpush.msra.mxu0 %v1253
        %v1255 = vand.u32 %v1022, 4294901760
        %1256 = vmatmul.f32.gmra.mxu0 %v1255
        %v1257 = vpop.f32.mrf.mxu0
        %v1258 = vadd.f32 %v1224, %v1257
        %v1259 = vand.u32 %v1025, 4294901760
        %1260 = vmatmul.f32.gmra.mxu0 %v1259
        %v1261 = vpop.f32.mrf.mxu0
        %v1262 = vadd.f32 %v1228, %v1261
        %v1263 = vand.u32 %v1028, 4294901760
        %1264 = vmatmul.f32.gmra.mxu0 %v1263
        %v1265 = vpop.f32.mrf.mxu0
        %v1266 = vadd.f32 %v1232, %v1265
        %v1267 = vand.u32 %v1031, 4294901760
        %1268 = vmatmul.f32.gmra.mxu0 %v1267
        %v1269 = vpop.f32.mrf.mxu0
        %v1270 = vadd.f32 %v1236, %v1269
        %1271 = vdwg.mxu0
        %v1272 = vmul.f32 %v1258, %v1258
        %v1273 = vmul.f32 %v1262, %v1262
        %v1274 = vmul.f32 %v1266, %v1266
        %v1275 = vmul.f32 %v1270, %v1270
        %v1276 = vadd.f32 %v1272, %v1273
        %v1277 = vadd.f32 %v1276, %v1274
        %v1278 = vadd.f32 %v1277, %v1275
        %v1279 = vrot.slane %v1278, 4
        %v1280 = vadd.f32 %v1278, %v1279
        %v1281 = vrot.slane %v1280, 2
        %v1282 = vadd.f32 %v1280, %v1281
        %v1283 = vrot.slane %v1282, 1
        %v1284 = vadd.f32 %v1282, %v1283
        %v1285 = vrsqrt.pop %v1284
        %v1286 = vmul.f32 %v1285, %v1284
        %v1287 = vmul.f32 %v1286, %v1285
        %v1288 = vmul.f32 0.5, %v1287
        %v1289 = vsub.f32 1.5, %v1288
        %v1290 = vmul.f32 %v1285, %v1289
        %v1291 = vmul.f32 %v1284, %v1290
        %vm1292 = vcmp.eq.f32.partialorder %v1284, inf
        %v1293 = vsel %vm1292, %v1284, %v1291
        %vm1294 = vcmp.eq.f32.partialorder %v1284, 0.0
        %v1295 = vand.u32 %v1284, 2147483648
        %v1296 = vsel %vm1294, %v1295, %v1293
        %v1297 = vadd.f32 %v1296, 1e-08
        %v1298 = vrcp.pop %v1297
        %v1299 = vmul.f32 %v1297, %v1298
        %v1300 = vsub.f32 1.0, %v1299
        %v1301 = vmul.f32 %v1298, %v1300
        %v1302 = vadd.f32 %v1298, %v1301
        %vm1303 = vweird.f32 %v1297
        %vm1304 = vweird.f32 %v1298
        %vm1305 = vmor %vm1303, %vm1304
        %v1306 = vsel %vm1305, %v1298, %v1302
        %v1307 = vand.u32 2147483647, %v1297
        %vm1308 = vcmp.eq.f32.partialorder %v1307, 8.507059e+37
        %v1309 = vand.u32 %v1297, 2147483648
        %v1310 = vor.u32 1.1754944e-38, %v1309
        %v1311 = vsel %vm1308, %v1310, %v1306
        %v1312 = vmul.f32 %v1258, %v1311
        %v1313 = vmul.f32 %v1262, %v1311
        %v1314 = vmul.f32 %v1266, %v1311
        %v1315 = vmul.f32 %v1270, %v1311
        %1316 = vmatpush.msra.mxu0 0.0
        %1317 = vmatpush.msra.mxu0 0.0
        %1318 = vmatpush.msra.mxu0 0.0
        %1319 = vmatpush.msra.mxu0 0.0
        %1320 = vmatpush.msra.mxu0 0.0
        %1321 = vmatpush.msra.mxu0 0.0
        %1322 = vmatpush.msra.mxu0 0.0
        %1323 = vmatpush.msra.mxu0 0.0
        %1324 = vmatpush.msra.mxu0 0.0
        %1325 = vmatpush.msra.mxu0 0.0
        %1326 = vmatpush.msra.mxu0 0.0
        %1327 = vmatpush.msra.mxu0 0.0
        %v1328 = vand.u32 %v1315, 4294901760
        %1329 = vmatpush.msra.mxu0 %v1328
        %v1330 = vand.u32 %v1314, 4294901760
        %1331 = vmatpush.msra.mxu0 %v1330
        %v1332 = vand.u32 %v1313, 4294901760
        %1333 = vmatpush.msra.mxu0 %v1332
        %v1334 = vand.u32 %v1312, 4294901760
        %1335 = vmatpush.msra.mxu0 %v1334
        %v1336 = vand.u32 %v341, 4294901760
        %v1337 = vsub.f32 %v341, %v1336
        %v1338 = vand.u32 %v1337, 4294901760
        %v1339 = vsub.f32 %v1337, %v1338
        %v1340 = vand.u32 %v1339, 4294901760
        %1341 = vmatmul.f32.gmra.mxu0 %v1340
        %v1342 = vpop.f32.mrf.mxu0
        %v1343 = vadd.f32 0.0, %v1342
        %1344 = vdwg.mxu0
        %1345 = vmatpush.msra.mxu0 0.0
        %1346 = vmatpush.msra.mxu0 0.0
        %1347 = vmatpush.msra.mxu0 0.0
        %1348 = vmatpush.msra.mxu0 0.0
        %1349 = vmatpush.msra.mxu0 0.0
        %1350 = vmatpush.msra.mxu0 0.0
        %1351 = vmatpush.msra.mxu0 0.0
        %1352 = vmatpush.msra.mxu0 0.0
        %1353 = vmatpush.msra.mxu0 0.0
        %1354 = vmatpush.msra.mxu0 0.0
        %1355 = vmatpush.msra.mxu0 0.0
        %1356 = vmatpush.msra.mxu0 0.0
        %v1357 = vand.u32 %v1315, 4294901760
        %v1358 = vsub.f32 %v1315, %v1357
        %v1359 = vand.u32 %v1358, 4294901760
        %v1360 = vsub.f32 %v1358, %v1359
        %v1361 = vand.u32 %v1360, 4294901760
        %1362 = vmatpush.msra.mxu0 %v1361
        %v1363 = vand.u32 %v1314, 4294901760
        %v1364 = vsub.f32 %v1314, %v1363
        %v1365 = vand.u32 %v1364, 4294901760
        %v1366 = vsub.f32 %v1364, %v1365
        %v1367 = vand.u32 %v1366, 4294901760
        %1368 = vmatpush.msra.mxu0 %v1367
        %v1369 = vand.u32 %v1313, 4294901760
        %v1370 = vsub.f32 %v1313, %v1369
        %v1371 = vand.u32 %v1370, 4294901760
        %v1372 = vsub.f32 %v1370, %v1371
        %v1373 = vand.u32 %v1372, 4294901760
        %1374 = vmatpush.msra.mxu0 %v1373
        %v1375 = vand.u32 %v1312, 4294901760
        %v1376 = vsub.f32 %v1312, %v1375
        %v1377 = vand.u32 %v1376, 4294901760
        %v1378 = vsub.f32 %v1376, %v1377
        %v1379 = vand.u32 %v1378, 4294901760
        %1380 = vmatpush.msra.mxu0 %v1379
        %v1381 = vand.u32 %v341, 4294901760
        %1382 = vmatmul.f32.gmra.mxu0 %v1381
        %v1383 = vpop.f32.mrf.mxu0
        %v1384 = vadd.f32 %v1343, %v1383
        %1385 = vdwg.mxu0
        %1386 = vmatpush.msra.mxu0 0.0
        %1387 = vmatpush.msra.mxu0 0.0
        %1388 = vmatpush.msra.mxu0 0.0
        %1389 = vmatpush.msra.mxu0 0.0
        %1390 = vmatpush.msra.mxu0 0.0
        %1391 = vmatpush.msra.mxu0 0.0
        %1392 = vmatpush.msra.mxu0 0.0
        %1393 = vmatpush.msra.mxu0 0.0
        %1394 = vmatpush.msra.mxu0 0.0
        %1395 = vmatpush.msra.mxu0 0.0
        %1396 = vmatpush.msra.mxu0 0.0
        %1397 = vmatpush.msra.mxu0 0.0
        %v1398 = vand.u32 %v1315, 4294901760
        %v1399 = vsub.f32 %v1315, %v1398
        %1400 = vmatpush.msra.mxu0 %v1399
        %v1401 = vand.u32 %v1314, 4294901760
        %v1402 = vsub.f32 %v1314, %v1401
        %1403 = vmatpush.msra.mxu0 %v1402
        %v1404 = vand.u32 %v1313, 4294901760
        %v1405 = vsub.f32 %v1313, %v1404
        %1406 = vmatpush.msra.mxu0 %v1405
        %v1407 = vand.u32 %v1312, 4294901760
        %v1408 = vsub.f32 %v1312, %v1407
        %1409 = vmatpush.msra.mxu0 %v1408
        %v1410 = vand.u32 %v341, 4294901760
        %v1411 = vsub.f32 %v341, %v1410
        %1412 = vmatmul.f32.gmra.mxu0 %v1411
        %v1413 = vpop.f32.mrf.mxu0
        %v1414 = vadd.f32 %v1384, %v1413
        %1415 = vdwg.mxu0
        %1416 = vmatpush.msra.mxu0 0.0
        %1417 = vmatpush.msra.mxu0 0.0
        %1418 = vmatpush.msra.mxu0 0.0
        %1419 = vmatpush.msra.mxu0 0.0
        %1420 = vmatpush.msra.mxu0 0.0
        %1421 = vmatpush.msra.mxu0 0.0
        %1422 = vmatpush.msra.mxu0 0.0
        %1423 = vmatpush.msra.mxu0 0.0
        %1424 = vmatpush.msra.mxu0 0.0
        %1425 = vmatpush.msra.mxu0 0.0
        %1426 = vmatpush.msra.mxu0 0.0
        %1427 = vmatpush.msra.mxu0 0.0
        %v1428 = vand.u32 %v1315, 4294901760
        %1429 = vmatpush.msra.mxu0 %v1428
        %v1430 = vand.u32 %v1314, 4294901760
        %1431 = vmatpush.msra.mxu0 %v1430
        %v1432 = vand.u32 %v1313, 4294901760
        %1433 = vmatpush.msra.mxu0 %v1432
        %v1434 = vand.u32 %v1312, 4294901760
        %1435 = vmatpush.msra.mxu0 %v1434
        %v1436 = vand.u32 %v341, 4294901760
        %v1437 = vsub.f32 %v341, %v1436
        %v1438 = vand.u32 %v1437, 4294901760
        %1439 = vmatmul.f32.gmra.mxu0 %v1438
        %v1440 = vpop.f32.mrf.mxu0
        %v1441 = vadd.f32 %v1414, %v1440
        %1442 = vdwg.mxu0
        %1443 = vmatpush.msra.mxu0 0.0
        %1444 = vmatpush.msra.mxu0 0.0
        %1445 = vmatpush.msra.mxu0 0.0
        %1446 = vmatpush.msra.mxu0 0.0
        %1447 = vmatpush.msra.mxu0 0.0
        %1448 = vmatpush.msra.mxu0 0.0
        %1449 = vmatpush.msra.mxu0 0.0
        %1450 = vmatpush.msra.mxu0 0.0
        %1451 = vmatpush.msra.mxu0 0.0
        %1452 = vmatpush.msra.mxu0 0.0
        %1453 = vmatpush.msra.mxu0 0.0
        %1454 = vmatpush.msra.mxu0 0.0
        %v1455 = vand.u32 %v1315, 4294901760
        %v1456 = vsub.f32 %v1315, %v1455
        %v1457 = vand.u32 %v1456, 4294901760
        %1458 = vmatpush.msra.mxu0 %v1457
        %v1459 = vand.u32 %v1314, 4294901760
        %v1460 = vsub.f32 %v1314, %v1459
        %v1461 = vand.u32 %v1460, 4294901760
        %1462 = vmatpush.msra.mxu0 %v1461
        %v1463 = vand.u32 %v1313, 4294901760
        %v1464 = vsub.f32 %v1313, %v1463
        %v1465 = vand.u32 %v1464, 4294901760
        %1466 = vmatpush.msra.mxu0 %v1465
        %v1467 = vand.u32 %v1312, 4294901760
        %v1468 = vsub.f32 %v1312, %v1467
        %v1469 = vand.u32 %v1468, 4294901760
        %1470 = vmatpush.msra.mxu0 %v1469
        %v1471 = vand.u32 %v341, 4294901760
        %1472 = vmatmul.f32.gmra.mxu0 %v1471
        %v1473 = vpop.f32.mrf.mxu0
        %v1474 = vadd.f32 %v1441, %v1473
        %1475 = vdwg.mxu0
        %1476 = vmatpush.msra.mxu0 0.0
        %1477 = vmatpush.msra.mxu0 0.0
        %1478 = vmatpush.msra.mxu0 0.0
        %1479 = vmatpush.msra.mxu0 0.0
        %1480 = vmatpush.msra.mxu0 0.0
        %1481 = vmatpush.msra.mxu0 0.0
        %1482 = vmatpush.msra.mxu0 0.0
        %1483 = vmatpush.msra.mxu0 0.0
        %1484 = vmatpush.msra.mxu0 0.0
        %1485 = vmatpush.msra.mxu0 0.0
        %1486 = vmatpush.msra.mxu0 0.0
        %1487 = vmatpush.msra.mxu0 0.0
        %v1488 = vand.u32 %v1315, 4294901760
        %1489 = vmatpush.msra.mxu0 %v1488
        %v1490 = vand.u32 %v1314, 4294901760
        %1491 = vmatpush.msra.mxu0 %v1490
        %v1492 = vand.u32 %v1313, 4294901760
        %1493 = vmatpush.msra.mxu0 %v1492
        %v1494 = vand.u32 %v1312, 4294901760
        %1495 = vmatpush.msra.mxu0 %v1494
        %v1496 = vand.u32 %v341, 4294901760
        %1497 = vmatmul.f32.gmra.mxu0 %v1496
        %v1498 = vpop.f32.mrf.mxu0
        %v1499 = vadd.f32 %v1474, %v1498
        %1500 = vdwg.mxu0
        %v1501 = vmul.f32 %v1499, 2.5
        %v1502 = vadd.f32 %v730, %v1501
        %v1503 = vrot.slane %v1502, 4
        %v1504 = vmax.f32 %v1502, %v1503
        %v1505 = vrot.slane %v1504, 2
        %v1506 = vmax.f32 %v1504, %v1505
        %v1507 = vrot.slane %v1506, 1
        %v1508 = vmax.f32 %v1506, %v1507
        %v1509 = vsub.f32 %v1502, %v1508
        %v1510 = vmul.f32 %v1509, 1.442695
        %v1511 = vpow.pop %v1510
        %v1512 = vrot.slane %v1511, 4
        %v1513 = vadd.f32 %v1511, %v1512
        %v1514 = vrot.slane %v1513, 2
        %v1515 = vadd.f32 %v1513, %v1514
        %v1516 = vrot.slane %v1515, 1
        %v1517 = vadd.f32 %v1515, %v1516
        %v1518 = vlog2.pop %v1517
        %v1519 = vmul.f32 %v1518, 0.6931472
        %v1520 = vadd.f32 %v1508, %v1519
        %v1521 = vmul.f32 %v1502, %v753
        %v1522 = vrot.slane %v1521, 4
        %v1523 = vadd.f32 %v1521, %v1522
        %v1524 = vrot.slane %v1523, 2
        %v1525 = vadd.f32 %v1523, %v1524
        %v1526 = vrot.slane %v1525, 1
        %v1527 = vadd.f32 %v1525, %v1526
        %v1528 = vsub.f32 %v1520, %v1527
        %v1529 = vlaneseq
        %v1530 = vand.u32 %v1529, 127
        %s1531 = smul.u32 %s19, 128
        %v1532 = vstv %s1531
        %v1533 = vadd.s32 %v1532, %v1530
        %vm1534 = vcmp.lt.s32.totalorder %v1533, 200
        %v1535 = vsel %vm1534, %v1528, 0.0
        %vm1536 = vcmask 1040384
        %v1537 = vsel %vm1536, %v1535, 0.0
        %1538 = vadd.xlane.f32.xlu0 %v1537
        %v1539 = vpop.xlane.xlu0 %1538
        %v1540 = vrot.slane %v1539, 4
        %v1541 = vadd.f32 %v1539, %v1540
        %v1542 = vrot.slane %v1541, 2
        %v1543 = vadd.f32 %v1541, %v1542
        %v1544 = vrot.slane %v1543, 1
        %v1545 = vadd.f32 %v1543, %v1544
        %s1546 = vtos %v1545
        %vm1547 = vcmp.eq.s32.totalorder %v733, 0
        %vm1548 = vcmp.eq.s32.totalorder %v1530, 0
        %vm1549 = vmand %vm1547, %vm1548
        %v1550 = vstv %s1546
        %v1551 = vsel %vm1549, %v1550, 0.0
        %1552 = vst [vmem:[%s297] sm:$0xff] %v1551
        %s1553 = sand.u32 %s142, 1
        %s1554 = scalar_lea.sflag [#allocation4], %s1553
        %s1555 = sand.u32 %s142, 1
        %s1556 = smul.addr %s1555, 8
        %s1557 = scalar_lea.vmem [#allocation3], %s1556
        // Predicated region
        $region79: #{tpu_custom_call.1} parent=73 // pred_check
          %p1558 = pneg %p152
        $region80: #{tpu_custom_call.1} parent=73 // pred_check_branch
          %1560 = sbr.rel (%p1558) target = $region82
        $region81: #{tpu_custom_call.1} parent=73 // pred_region
          %1562 = vsyncadd %s1554, 0
          %s1563 = smul.addr %s19, 8
          %s1564 = scalar_lea.hbm %s5, %s1563
          %s1566 = sshll.u32 %s1557, 4
          %s1567 = int_to_ptr.vmem [resolvable:$true] %s1566
          %s1568 = sshll.u32 %s1564, 4
          %s1569 = int_to_ptr.hbm [resolvable:$true] %s1568
          %1571 = dma.vmem_to_hbm [thread:$0]  %s1567, 128, %s1569, %s1554
        $region82: #{tpu_custom_call.1} parent=73 // pred_fallthru
          _
      $region74: #{tpu_custom_call.1} parent=5 // pred_fallthru
        _
      %p1572 = scmp.le.s32.totalorder 2, %s14
      // Predicated region
      $region83: #{tpu_custom_call.1} parent=5 // pred_check
        %p1573 = pneg %p1572
      $region84: #{tpu_custom_call.1} parent=5 // pred_check_branch
        %1575 = sbr.rel (%p1573) target = $region86
      $region85: #{tpu_custom_call.1} parent=5 // pred_region
        %s1576 = ssub.s32 %s14, 2
        // Predicated region
        $region87: #{tpu_custom_call.1} parent=85 // pred_check
          %p1577 = pneg %p158
        $region88: #{tpu_custom_call.1} parent=85 // pred_check_branch
          %1579 = sbr.rel (%p1577) target = $region90
        $region89: #{tpu_custom_call.1} parent=85 // pred_region
          %s1580 = sand.u32 %s143, 1
          %s1581 = scalar_lea.sflag [#allocation4], %s1580
          %s1582 = sand.u32 %s143, 1
          %s1583 = smul.addr %s1582, 8
          %s1584 = scalar_lea.vmem [#allocation3], %s1583
          %1586 = dma.done %s1581, 128
        $region90: #{tpu_custom_call.1} parent=85 // pred_fallthru
          _
      $region86: #{tpu_custom_call.1} parent=5 // pred_fallthru
        _
    $region6: #{tpu_custom_call.1} parent=1 // loop_footer
      %s18 = sadd.s32 1, %s14
    $region7: #{tpu_custom_call.1} parent=1 // loop_footer_branch
      %13 = sbr.rel target = $region3
    $region8: #{tpu_custom_call.1} parent=1 // loop_exit
      _
    %1587 = vsyncpa [#allocation4], 1
    %s1588 = scalar_lea.sflag [#allocation4], 1
    %1589 = vsyncpa %s1588, 1

</llo_original>
